<compile_context>
chip_gen: v5e
topology: v5e:2x2
jax: 0.10.0
libtpu: 0.0.40
codegen_flags: <defaults>
</compile_context>

<pallas_src>
import functools

import jax
import jax.numpy as jnp
from jax.experimental import pallas as pl
from jax.experimental.pallas import tpu as pltpu

_EPS = 1e-12                    # matches torch.nn.functional.normalize default eps
_FEATURE_DTYPE = jnp.float32    # bf16 halves DMA/VMEM but loosens precision


def _pixel_sim_kernel(fsl_ref, ftl_ref, fsr_ref, ftr_ref, out_ref, *, tj, num_j):
    """One grid step handles Gram row panel q of batch element b.

    fsl_ref, ftl_ref : VMEM refs (1, TQ, C)      -- MXU-native (M, K) row panels
    fsr_ref, ftr_ref : VMEM refs (1, C, HW_pad)  -- full RHS slabs (resident per b)
    out_ref          : VMEM ref  (1, 1, 8, 128)  -- lane-dense per-(b, q) partial
    """
    fs_q = fsl_ref[0]            # (TQ, C)
    ft_q = ftl_ref[0]            # (TQ, C)
    tq = fs_q.shape[0]

    def partial_sums(ks, kt, carry):
        ss, tt, st = carry
        # Row panel x column chunk of the Gram matrices; f32 MXU accumulate.
        a_s = jnp.dot(fs_q, ks, preferred_element_type=jnp.float32)   # (TQ, TJ)
        a_t = jnp.dot(ft_q, kt, preferred_element_type=jnp.float32)   # (TQ, TJ)
        ss = ss + jnp.sum(a_s * a_s, axis=1, keepdims=True)
        tt = tt + jnp.sum(a_t * a_t, axis=1, keepdims=True)
        st = st + jnp.sum(a_s * a_t, axis=1, keepdims=True)
        return ss, tt, st

    zeros = jnp.zeros((tq, 1), jnp.float32)
    init = (zeros, zeros, zeros)
    if num_j == 1:
        # Single column chunk: the whole slab is the chunk (no loop, no slice).
        ss, tt, st = partial_sums(fsr_ref[0], ftr_ref[0], init)
    else:
        def body(j, carry):
            start = pl.multiple_of(j * tj, tj)      # tj is a multiple of 128
            ks = fsr_ref[0, :, pl.ds(start, tj)]    # ref slice -> direct load
            kt = ftr_ref[0, :, pl.ds(start, tj)]
            return partial_sums(ks, kt, carry)
        ss, tt, st = jax.lax.fori_loop(0, num_j, body, init)

    # F.normalize(A, dim=1) eps clamp:  1 / max(||row||, eps) == rsqrt(max(s, eps^2)).
    eps_sq = jnp.float32(_EPS * _EPS)
    inv_s = jax.lax.rsqrt(jnp.maximum(ss, eps_sq))
    inv_t = jax.lax.rsqrt(jnp.maximum(tt, eps_sq))

    # Per-row ||a_s_hat - a_t_hat||^2 via the cosine identity (exact, incl. padding).
    per_row = (ss * (inv_s * inv_s)
               + tt * (inv_t * inv_t)
               - 2.0 * st * (inv_s * inv_t))
    partial = jnp.sum(per_row)

    # Lane-dense output tile; the wrapper reads [..., 0, 0].
    out_ref[...] = jnp.full((1, 1, 8, 128), partial, dtype=jnp.float32)


def _largest_tile(total, cap):
    """Largest multiple-of-128 divisor of `total` (itself a multiple of 128) <= cap."""
    best = 128
    d = 128
    limit = min(total, cap)
    while d <= limit:
        if total % d == 0:
            best = d
        d += 128
    return best


def pixel_sim_loss(featmap_src_T, featmap_tgt_S):
    """featmap_*: (B, C, H, W) float arrays (NCHW, like the PyTorch module)."""
    B, C, H, W = featmap_src_T.shape
    HW = H * W
    HW_pad = ((HW + 127) // 128) * 128

    # ---- generation-dependent tiling and explicit VMEM budget ----------------
    try:
        info = pltpu.get_tpu_info()
        vmem_cap = getattr(info, "vmem_capacity_bytes", None) or (64 << 20)
    except Exception:
        vmem_cap = 64 << 20                       # conservative (v7x-sized) fallback
    big_vmem = vmem_cap >= (96 << 20)             # v5e / v6e (128 MiB) vs v7x (64 MiB)
    if big_vmem:
        vmem_limit = 100 << 20
        tq_cap, tj_cap = 512, 4096
    else:
        vmem_limit = min(vmem_cap - (8 << 20), 56 << 20)
        tq_cap, tj_cap = 256, 2048

    # ---- layout prep (wrapper-side plumbing, not compute) --------------------
    f_src = featmap_src_T.reshape(B, C, HW).astype(_FEATURE_DTYPE)
    f_tgt = featmap_tgt_S.reshape(B, C, HW).astype(_FEATURE_DTYPE)
    if HW_pad != HW:
        pad = ((0, 0), (0, 0), (0, HW_pad - HW))
        f_src = jnp.pad(f_src, pad)   # zero pixel columns/rows are inert for this loss
        f_tgt = jnp.pad(f_tgt, pad)

    # MXU-native (M, K) copies for the LHS row panels: each (1, TQ, C) panel is
    # its own pipelined DMA block -> no in-kernel slice, no transpose.
    f_src_t = jnp.swapaxes(f_src, 1, 2)           # (B, HW_pad, C)
    f_tgt_t = jnp.swapaxes(f_tgt, 1, 2)

    tq = _largest_tile(HW_pad, tq_cap)            # Gram row-panel height
    tj = _largest_tile(HW_pad, tj_cap)            # Gram column-chunk width
    num_q = HW_pad // tq
    num_j = HW_pad // tj

    kernel = functools.partial(_pixel_sim_kernel, tj=tj, num_j=num_j)
    partials = pl.pallas_call(
        kernel,
        out_shape=jax.ShapeDtypeStruct((B, num_q, 8, 128), jnp.float32),
        grid_spec=pltpu.PrefetchScalarGridSpec(
            num_scalar_prefetch=0,
            grid=(B, num_q),
            in_specs=[
                # Row panels (indexed by q) -> pipelined per grid step.
                pl.BlockSpec((1, tq, C), lambda b, q: (b, q, 0)),
                pl.BlockSpec((1, tq, C), lambda b, q: (b, q, 0)),
                # Full RHS slabs: block index constant in q -> DMAed once per b.
                pl.BlockSpec((1, C, HW_pad), lambda b, q: (b, 0, 0)),
                pl.BlockSpec((1, C, HW_pad), lambda b, q: (b, 0, 0)),
            ],
            out_specs=pl.BlockSpec((1, 1, 8, 128), lambda b, q: (b, q, 0, 0)),
        ),
        compiler_params=pltpu.CompilerParams(
            # Every (b, q) step writes its own output block -> fully independent;
            # lets the grid shard across v7x's two TensorCores.
            dimension_semantics=("parallel", "parallel"),
            vmem_limit_bytes=int(vmem_limit),
        ),
    )(f_src_t, f_tgt_t, f_src, f_tgt)

    # Tiny final reduction; divide by the ORIGINAL H*W, then average over B.
    return (jnp.sum(partials[:, :, 0, 0]) / jnp.float32(HW * B)).astype(jnp.float32)


def _pixel_sim_loss_ref(featmap_src_T, featmap_tgt_S):
    """Pure-JAX reference mirroring the PyTorch forward (for verification)."""
    B, C, H, W = featmap_src_T.shape
    HW = H * W
    loss = 0.0
    for b in range(B):
        fs = featmap_src_T[b].reshape(C, HW).astype(jnp.float32)
        ft = featmap_tgt_S[b].reshape(C, HW).astype(jnp.float32)
        a_s = fs.T @ fs
        a_t = ft.T @ ft
        a_s = a_s / jnp.maximum(jnp.linalg.norm(a_s, axis=1, keepdims=True), _EPS)
        a_t = a_t / jnp.maximum(jnp.linalg.norm(a_t, axis=1, keepdims=True), _EPS)
        loss = loss + jnp.sum((a_s - a_t) ** 2) / HW
    return loss / B


if __name__ == "__main__":
    key = jax.random.PRNGKey(0)

    # Case 1: lane-aligned spatial size (HW = 256), single row panel / column chunk.
    B, C, H, W = 2, 4, 16, 16
    k1, k2, k3, k4 = jax.random.split(key, 4)
    src1 = jax.random.normal(k1, (B, C, H, W), dtype=jnp.float32)
    tgt1 = jax.random.normal(k2, (B, C, H, W), dtype=jnp.float32)
    out1 = jax.block_until_ready(pixel_sim_loss(src1, tgt1))
    ref1 = _pixel_sim_loss_ref(src1, tgt1)
    assert jnp.allclose(out1, ref1, rtol=1e-5, atol=1e-5), (out1, ref1)

    # Case 2: unaligned HW (20*20 = 400 -> padded to 512); exercises padding and
    # (on 64 MiB-class chips) a 2-panel row split.
    B2, C2, H2, W2 = 2, 4, 20, 20
    src2 = jax.random.normal(k3, (B2, C2, H2, W2), dtype=jnp.float32)
    tgt2 = jax.random.normal(k4, (B2, C2, H2, W2), dtype=jnp.float32)
    out2 = jax.block_until_ready(pixel_sim_loss(src2, tgt2))
    ref2 = _pixel_sim_loss_ref(src2, tgt2)
    assert jnp.allclose(out2, ref2, rtol=1e-5, atol=1e-5), (out2, ref2)

    print("KERNEL_OK")
</pallas_src>

<mosaic_0001>
module attributes {stable_mosaic.version = 11 : i64} {
  func.func @_pixel_sim_kernel(%arg0: i32, %arg1: i32, %arg2: memref<1x256x4xf32, #tpu.memory_space<vmem>>, %arg3: memref<1x256x4xf32, #tpu.memory_space<vmem>>, %arg4: memref<1x4x256xf32, #tpu.memory_space<vmem>>, %arg5: memref<1x4x256xf32, #tpu.memory_space<vmem>>, %arg6: memref<1x1x8x128xf32, #tpu.memory_space<vmem>>) attributes {dimension_semantics = [#tpu.dimension_semantics<parallel>, #tpu.dimension_semantics<parallel>], iteration_bounds = array<i64: 2, 1>, scalar_prefetch = 0 : i64, scratch_operands = 0 : i64, tpu.core_type = #tpu.core_type<tc>, window_params = [{transform_indices = @transform_0, window_bounds = array<i64: 1, 256, 4>}, {transform_indices = @transform_1, window_bounds = array<i64: 1, 256, 4>}, {transform_indices = @transform_2, window_bounds = array<i64: 1, 4, 256>}, {transform_indices = @transform_3, window_bounds = array<i64: 1, 4, 256>}, {transform_indices = @transform_4, window_bounds = array<i64: 1, 1, 8, 128>}]} {
    %c0 = arith.constant 0 : index
    %c0_0 = arith.constant 0 : index
    %c0_1 = arith.constant 0 : index
    %0 = vector.load %arg2[%c0, %c0_0, %c0_1] : memref<1x256x4xf32, #tpu.memory_space<vmem>>, vector<1x256x4xf32>
    %1 = vector.shape_cast %0 : vector<1x256x4xf32> to vector<256x4xf32>
    %c0_2 = arith.constant 0 : index
    %c0_3 = arith.constant 0 : index
    %c0_4 = arith.constant 0 : index
    %2 = vector.load %arg3[%c0_2, %c0_3, %c0_4] : memref<1x256x4xf32, #tpu.memory_space<vmem>>, vector<1x256x4xf32>
    %3 = vector.shape_cast %2 : vector<1x256x4xf32> to vector<256x4xf32>
    %cst = arith.constant 0.000000e+00 : f32
    %4 = vector.broadcast %cst : f32 to vector<256x1xf32>
    %c0_5 = arith.constant 0 : index
    %c0_6 = arith.constant 0 : index
    %c0_7 = arith.constant 0 : index
    %5 = vector.load %arg4[%c0_5, %c0_6, %c0_7] : memref<1x4x256xf32, #tpu.memory_space<vmem>>, vector<1x4x256xf32>
    %6 = vector.shape_cast %5 : vector<1x4x256xf32> to vector<4x256xf32>
    %c0_8 = arith.constant 0 : index
    %c0_9 = arith.constant 0 : index
    %c0_10 = arith.constant 0 : index
    %7 = vector.load %arg5[%c0_8, %c0_9, %c0_10] : memref<1x4x256xf32, #tpu.memory_space<vmem>>, vector<1x4x256xf32>
    %8 = vector.shape_cast %7 : vector<1x4x256xf32> to vector<4x256xf32>
    %cst_11 = arith.constant dense<0.000000e+00> : vector<256x256xf32>
    %9 = tpu.matmul %1, %6, %cst_11 {dimension_numbers = #tpu.dot_dimension_numbers<[1], [0], [0], [1], [0, 0, 1, 1], [], []>} : vector<256x4xf32>, vector<4x256xf32>, vector<256x256xf32> -> vector<256x256xf32>
    %cst_12 = arith.constant dense<0.000000e+00> : vector<256x256xf32>
    %10 = tpu.matmul %3, %8, %cst_12 {dimension_numbers = #tpu.dot_dimension_numbers<[1], [0], [0], [1], [0, 0, 1, 1], [], []>} : vector<256x4xf32>, vector<4x256xf32>, vector<256x256xf32> -> vector<256x256xf32>
    %11 = arith.mulf %9, %9 : vector<256x256xf32>
    %cst_13 = arith.constant dense<0.000000e+00> : vector<256xf32>
    %12 = vector.multi_reduction <add>, %11, %cst_13 [1] : vector<256x256xf32> to vector<256xf32>
    %13 = vector.shape_cast %12 : vector<256xf32> to vector<256x1xf32>
    %14 = arith.addf %4, %13 : vector<256x1xf32>
    %15 = arith.mulf %10, %10 : vector<256x256xf32>
    %cst_14 = arith.constant dense<0.000000e+00> : vector<256xf32>
    %16 = vector.multi_reduction <add>, %15, %cst_14 [1] : vector<256x256xf32> to vector<256xf32>
    %17 = vector.shape_cast %16 : vector<256xf32> to vector<256x1xf32>
    %18 = arith.addf %4, %17 : vector<256x1xf32>
    %19 = arith.mulf %9, %10 : vector<256x256xf32>
    %cst_15 = arith.constant dense<0.000000e+00> : vector<256xf32>
    %20 = vector.multi_reduction <add>, %19, %cst_15 [1] : vector<256x256xf32> to vector<256xf32>
    %21 = vector.shape_cast %20 : vector<256xf32> to vector<256x1xf32>
    %22 = arith.addf %4, %21 : vector<256x1xf32>
    %cst_16 = arith.constant 1.000000e-24 : f32
    %23 = vector.broadcast %cst_16 : f32 to vector<256x1xf32>
    %24 = arith.maximumf %14, %23 : vector<256x1xf32>
    %25 = math.rsqrt %24 : vector<256x1xf32>
    %cst_17 = arith.constant 1.000000e-24 : f32
    %26 = vector.broadcast %cst_17 : f32 to vector<256x1xf32>
    %27 = arith.maximumf %18, %26 : vector<256x1xf32>
    %28 = math.rsqrt %27 : vector<256x1xf32>
    %29 = arith.mulf %25, %25 : vector<256x1xf32>
    %30 = arith.mulf %14, %29 : vector<256x1xf32>
    %31 = arith.mulf %28, %28 : vector<256x1xf32>
    %32 = arith.mulf %18, %31 : vector<256x1xf32>
    %33 = arith.addf %30, %32 : vector<256x1xf32>
    %cst_18 = arith.constant 2.000000e+00 : f32
    %34 = vector.broadcast %cst_18 : f32 to vector<256x1xf32>
    %35 = arith.mulf %34, %22 : vector<256x1xf32>
    %36 = arith.mulf %25, %28 : vector<256x1xf32>
    %37 = arith.mulf %35, %36 : vector<256x1xf32>
    %38 = arith.subf %33, %37 : vector<256x1xf32>
    %39 = vector.shape_cast %38 : vector<256x1xf32> to vector<1x256x1xf32>
    %cst_19 = arith.constant dense<0.000000e+00> : vector<1xf32>
    %40 = vector.multi_reduction <add>, %39, %cst_19 [1, 2] : vector<1x256x1xf32> to vector<1xf32>
    %41 = vector.shape_cast %40 : vector<1xf32> to vector<1x1x1xf32>
    %42 = vector.extract %41[0, 0, 0] : f32 from vector<1x1x1xf32>
    %43 = vector.broadcast %42 : f32 to vector<1x1x8x128xf32>
    %c0_20 = arith.constant 0 : index
    %c0_21 = arith.constant 0 : index
    %c0_22 = arith.constant 0 : index
    %c0_23 = arith.constant 0 : index
    %44 = vector.load %arg6[%c0_20, %c0_21, %c0_22, %c0_23] : memref<1x1x8x128xf32, #tpu.memory_space<vmem>>, vector<1x1x8x128xf32>
    tpu.vector_store %arg6[%c0_20, %c0_21, %c0_22, %c0_23], %43 {strides = array<i32>} : memref<1x1x8x128xf32, #tpu.memory_space<vmem>>, vector<1x1x8x128xf32>,
    return
  }
  func.func @transform_0(%arg0: i32, %arg1: i32) -> (i32, i32, i32) {
    %c0_i32 = arith.constant 0 : i32
    %c0_i32_0 = arith.constant 0 : i32
    return %arg0, %arg1, %c0_i32 : i32, i32, i32
  }
  func.func @transform_1(%arg0: i32, %arg1: i32) -> (i32, i32, i32) {
    %c0_i32 = arith.constant 0 : i32
    %c0_i32_0 = arith.constant 0 : i32
    return %arg0, %arg1, %c0_i32 : i32, i32, i32
  }
  func.func @transform_2(%arg0: i32, %arg1: i32) -> (i32, i32, i32) {
    %c0_i32 = arith.constant 0 : i32
    %c0_i32_0 = arith.constant 0 : i32
    %c0_i32_1 = arith.constant 0 : i32
    return %arg0, %c0_i32, %c0_i32_0 : i32, i32, i32
  }
  func.func @transform_3(%arg0: i32, %arg1: i32) -> (i32, i32, i32) {
    %c0_i32 = arith.constant 0 : i32
    %c0_i32_0 = arith.constant 0 : i32
    %c0_i32_1 = arith.constant 0 : i32
    return %arg0, %c0_i32, %c0_i32_0 : i32, i32, i32
  }
  func.func @transform_4(%arg0: i32, %arg1: i32) -> (i32, i32, i32, i32) {
    %c0_i32 = arith.constant 0 : i32
    %c0_i32_0 = arith.constant 0 : i32
    %c0_i32_1 = arith.constant 0 : i32
    return %arg0, %arg1, %c0_i32, %c0_i32_0 : i32, i32, i32, i32
  }
}

</mosaic_0001>

<llo_original>
// kernel: tpu_custom_call.1
$region0: #{tpu_custom_call.1}
  #allocation0 [shape = 'u32[]', space=smem, size = 0x4, offset = 0x4, fixed_abs, tag = 'smem constant byte address 0x4 - core index']
  #allocation1 [shape = 'u32[72,128]{1,0:T(1,128)}', space=vmem, size = 0x9000, scoped, tag = 'internal scratch']
  %s0 = inlined_call_operand.vmem [shape: f32[2,256,4], index: 0, kind: input, shape index: {}]
  %s1 = inlined_call_operand.vmem [shape: f32[2,256,4], index: 1, kind: input, shape index: {}]
  %s2 = inlined_call_operand.vmem [shape: f32[2,4,256], index: 2, kind: input, shape index: {}]
  %s3 = inlined_call_operand.vmem [shape: f32[2,4,256], index: 3, kind: input, shape index: {}]
  %s4 = inlined_call_operand.hbm [shape: f32[2,1,8,128], index: 4, kind: output, shape index: {}]
  %s5 = sld [smem:[#allocation0]]
  $region49: #{tpu_custom_call.1} parent=0
    _
  %s7 = ssub.s32 1, %s5
  %s8 = scalar_select 0, %s7, %s5
  $region1: #{tpu_custom_call.1} parent=0
    #allocation2 [shape = 'u8[8192]{0}', space=vmem, size = 0x2000, scoped, tag = 'output window, operand 0']
    #allocation3 [shape = 's32[2]{0}', space=sflag, size = 0x8, scoped, tag = 'scoped memory for tpu_custom_call.1']
    %9 = vsyncpa [#allocation3], 0
    %s10 = scalar_lea.sflag [#allocation3], 1
    %11 = vsyncpa %s10, 0
    loop: start=0, step=1, limit=4
    $region2: #{tpu_custom_call.1} parent=1 // loop_pre_header
      _
    $region3: #{tpu_custom_call.1} parent=1 // loop_header
      %s13 = sphi 0, %s17
      %p14 = scmp.ge.s32.totalorder %s13, 4
      %s20 = sphi 0, %s32
      %s21 = sphi 0, %s28
      %s22 = sphi 0, %s20
      %s23 = sphi 0, %s21
      %s24 = sphi 0, %s22
      %s25 = sphi 0, %s23
      %s37 = sphi 0, %s39
      %s40 = sphi 0, %s37
      %s41 = sphi 0, %s40
      %s57 = sphi 0, %s41
      %s65 = sphi 0, %s67
      %s68 = sphi 0, %s65
      %s69 = sphi 0, %s68
      %s85 = sphi 0, %s69
      %s91 = sphi 0, %s93
      %s94 = sphi 0, %s91
      %s95 = sphi 0, %s94
      %s111 = sphi 0, %s95
      %s117 = sphi 0, %s119
      %s120 = sphi 0, %s117
      %s121 = sphi 0, %s120
      %s137 = sphi 0, %s121
      %s145 = sphi 0, %s147
      %s148 = sphi 0, %s145
      %s149 = sphi 0, %s148
      %s165 = sphi 0, %s149
    $region4: #{tpu_custom_call.1} parent=1 // loop_header_branch
      %16 = sbr.rel (%p14) target = $region8
    $region5: #{tpu_custom_call.1} parent=1 // loop_body
      %s18 = ssub.s32 %s13, 1
      %s19 = ssub.s32 %s13, 2
      %s26 = sadd.s32 1, %s21
      %p27 = scmp.ge.s32.totalorder %s26, 1
      %s28 = scalar_select %p27, 0, %s26
      %s29 = sadd.s32 1, %s20
      %s30 = scalar_select %p27, %s29, %s20
      %p31 = scmp.ge.s32.totalorder %s30, 2
      %s32 = scalar_select %p31, 0, %s30
      %s33 = ssub.s32 %s20, %s32
      %s34 = ssub.s32 %s21, %s28
      %s35 = sor.u32 %s33, %s34
      %p36 = scmp.eq.s32.totalorder %s35, 0
      %s38 = sadd.s32 %s37, 1
      %s39 = scalar_select %p36, %s37, %s38
      %p42 = pneg %p36
      %p43 = scmp.eq.s32.totalorder %s13, 1
      %p44 = por %p42, %p43
      %p45 = scmp.ne.s32.totalorder %s37, %s40
      %p46 = scmp.eq.s32.totalorder %s13, 0
      %p47 = por %p45, %p46
      %p48 = scmp.ne.s32.totalorder %s37, %s40
      %p49 = scmp.eq.s32.totalorder %s18, 1
      %p50 = por %p48, %p49
      %p51 = scmp.ne.s32.totalorder %s40, %s41
      %p52 = scmp.eq.s32.totalorder %s18, 0
      %p53 = por %p51, %p52
      %p54 = scmp.ne.s32.totalorder %s40, %s41
      %p55 = scmp.eq.s32.totalorder %s19, 1
      %p56 = por %p54, %p55
      %p58 = scmp.ne.s32.totalorder %s41, %s57
      %p59 = scmp.eq.s32.totalorder %s19, 0
      %p60 = por %p58, %p59
      %s61 = ssub.s32 %s20, %s32
      %s62 = ssub.s32 %s21, %s28
      %s63 = sor.u32 %s61, %s62
      %p64 = scmp.eq.s32.totalorder %s63, 0
      %s66 = sadd.s32 %s65, 1
      %s67 = scalar_select %p64, %s65, %s66
      %p70 = pneg %p64
      %p71 = scmp.eq.s32.totalorder %s13, 1
      %p72 = por %p70, %p71
      %p73 = scmp.ne.s32.totalorder %s65, %s68
      %p74 = scmp.eq.s32.totalorder %s13, 0
      %p75 = por %p73, %p74
      %p76 = scmp.ne.s32.totalorder %s65, %s68
      %p77 = scmp.eq.s32.totalorder %s18, 1
      %p78 = por %p76, %p77
      %p79 = scmp.ne.s32.totalorder %s68, %s69
      %p80 = scmp.eq.s32.totalorder %s18, 0
      %p81 = por %p79, %p80
      %p82 = scmp.ne.s32.totalorder %s68, %s69
      %p83 = scmp.eq.s32.totalorder %s19, 1
      %p84 = por %p82, %p83
      %p86 = scmp.ne.s32.totalorder %s69, %s85
      %p87 = scmp.eq.s32.totalorder %s19, 0
      %p88 = por %p86, %p87
      %s89 = ssub.s32 %s20, %s32
      %p90 = scmp.eq.s32.totalorder %s89, 0
      %s92 = sadd.s32 %s91, 1
      %s93 = scalar_select %p90, %s91, %s92
      %p96 = pneg %p90
      %p97 = scmp.eq.s32.totalorder %s13, 1
      %p98 = por %p96, %p97
      %p99 = scmp.ne.s32.totalorder %s91, %s94
      %p100 = scmp.eq.s32.totalorder %s13, 0
      %p101 = por %p99, %p100
      %p102 = scmp.ne.s32.totalorder %s91, %s94
      %p103 = scmp.eq.s32.totalorder %s18, 1
      %p104 = por %p102, %p103
      %p105 = scmp.ne.s32.totalorder %s94, %s95
      %p106 = scmp.eq.s32.totalorder %s18, 0
      %p107 = por %p105, %p106
      %p108 = scmp.ne.s32.totalorder %s94, %s95
      %p109 = scmp.eq.s32.totalorder %s19, 1
      %p110 = por %p108, %p109
      %p112 = scmp.ne.s32.totalorder %s95, %s111
      %p113 = scmp.eq.s32.totalorder %s19, 0
      %p114 = por %p112, %p113
      %s115 = ssub.s32 %s20, %s32
      %p116 = scmp.eq.s32.totalorder %s115, 0
      %s118 = sadd.s32 %s117, 1
      %s119 = scalar_select %p116, %s117, %s118
      %p122 = pneg %p116
      %p123 = scmp.eq.s32.totalorder %s13, 1
      %p124 = por %p122, %p123
      %p125 = scmp.ne.s32.totalorder %s117, %s120
      %p126 = scmp.eq.s32.totalorder %s13, 0
      %p127 = por %p125, %p126
      %p128 = scmp.ne.s32.totalorder %s117, %s120
      %p129 = scmp.eq.s32.totalorder %s18, 1
      %p130 = por %p128, %p129
      %p131 = scmp.ne.s32.totalorder %s120, %s121
      %p132 = scmp.eq.s32.totalorder %s18, 0
      %p133 = por %p131, %p132
      %p134 = scmp.ne.s32.totalorder %s120, %s121
      %p135 = scmp.eq.s32.totalorder %s19, 1
      %p136 = por %p134, %p135
      %p138 = scmp.ne.s32.totalorder %s121, %s137
      %p139 = scmp.eq.s32.totalorder %s19, 0
      %p140 = por %p138, %p139
      %s141 = ssub.s32 %s20, %s32
      %s142 = ssub.s32 %s21, %s28
      %s143 = sor.u32 %s141, %s142
      %p144 = scmp.eq.s32.totalorder %s143, 0
      %s146 = sadd.s32 %s145, 1
      %s147 = scalar_select %p144, %s145, %s146
      %p150 = pneg %p144
      %p151 = scmp.eq.s32.totalorder %s13, 1
      %p152 = por %p150, %p151
      %p153 = scmp.ne.s32.totalorder %s145, %s148
      %p154 = scmp.eq.s32.totalorder %s13, 0
      %p155 = por %p153, %p154
      %p156 = scmp.ne.s32.totalorder %s145, %s148
      %p157 = scmp.eq.s32.totalorder %s18, 1
      %p158 = por %p156, %p157
      %p159 = scmp.ne.s32.totalorder %s148, %s149
      %p160 = scmp.eq.s32.totalorder %s18, 0
      %p161 = por %p159, %p160
      %p162 = scmp.ne.s32.totalorder %s148, %s149
      %p163 = scmp.eq.s32.totalorder %s19, 1
      %p164 = por %p162, %p163
      %p166 = scmp.ne.s32.totalorder %s149, %s165
      %p167 = scmp.eq.s32.totalorder %s19, 0
      %p168 = por %p166, %p167
      %p169 = scmp.le.s32.totalorder 1, %s13
      %p170 = scmp.lt.s32.totalorder %s13, 3
      %p171 = pnand %p169, %p170
      %p172 = pneg %p171
      // Predicated region
      $region9: #{tpu_custom_call.1} parent=5 // pred_check
        _
      $region10: #{tpu_custom_call.1} parent=5 // pred_check_branch
        %174 = sbr.rel (%p171) target = $region12
      $region11: #{tpu_custom_call.1} parent=5 // pred_region
        %s175 = ssub.s32 %s13, 1
      $region12: #{tpu_custom_call.1} parent=5 // pred_fallthru
        _
      %p176 = scmp.lt.s32.totalorder %s13, 2
      // Predicated region
      $region13: #{tpu_custom_call.1} parent=5 // pred_check
        %p177 = pneg %p176
      $region14: #{tpu_custom_call.1} parent=5 // pred_check_branch
        %179 = sbr.rel (%p177) target = $region16
      $region15: #{tpu_custom_call.1} parent=5 // pred_region
        // Predicated region
        $region17: #{tpu_custom_call.1} parent=15 // pred_check
          %p180 = pneg %p47
        $region18: #{tpu_custom_call.1} parent=15 // pred_check_branch
          %182 = sbr.rel (%p180) target = $region20
        $region19: #{tpu_custom_call.1} parent=15 // pred_region
          %s183 = smul.u32 32, %s21
          %p184 = scmp.lt.s32.totalorder %s20, 1
          %s185 = scalar_select %p184, %s20, 1
          %p186 = scmp.lt.s32.totalorder %s183, 31
          %s187 = scalar_select %p186, %s183, 31
          %s188 = smul.addr %s185, 32
          %s189 = sadd.s32 %s187, %s188
          %s190 = smul.addr %s189, 8
          %s191 = scalar_lea.vmem %s0, %s190
          %s192 = smul.u32 32, %s21
        $region20: #{tpu_custom_call.1} parent=15 // pred_fallthru
          _
        // Predicated region
        $region21: #{tpu_custom_call.1} parent=15 // pred_check
          %p193 = pneg %p75
        $region22: #{tpu_custom_call.1} parent=15 // pred_check_branch
          %195 = sbr.rel (%p193) target = $region24
        $region23: #{tpu_custom_call.1} parent=15 // pred_region
          %s196 = smul.u32 32, %s21
          %p197 = scmp.lt.s32.totalorder %s20, 1
          %s198 = scalar_select %p197, %s20, 1
          %p199 = scmp.lt.s32.totalorder %s196, 31
          %s200 = scalar_select %p199, %s196, 31
          %s201 = smul.addr %s198, 32
          %s202 = sadd.s32 %s200, %s201
          %s203 = smul.addr %s202, 8
          %s204 = scalar_lea.vmem %s1, %s203
          %s205 = smul.u32 32, %s21
        $region24: #{tpu_custom_call.1} parent=15 // pred_fallthru
          _
        // Predicated region
        $region25: #{tpu_custom_call.1} parent=15 // pred_check
          %p206 = pneg %p101
        $region26: #{tpu_custom_call.1} parent=15 // pred_check_branch
          %208 = sbr.rel (%p206) target = $region28
        $region27: #{tpu_custom_call.1} parent=15 // pred_region
          %p209 = scmp.lt.s32.totalorder %s20, 1
          %s210 = scalar_select %p209, %s20, 1
          %s211 = smul.addr %s210, 2
          %s212 = smul.addr %s211, 4
          %s213 = scalar_lea.vmem %s2, %s212
        $region28: #{tpu_custom_call.1} parent=15 // pred_fallthru
          _
        // Predicated region
        $region29: #{tpu_custom_call.1} parent=15 // pred_check
          %p214 = pneg %p127
        $region30: #{tpu_custom_call.1} parent=15 // pred_check_branch
          %216 = sbr.rel (%p214) target = $region32
        $region31: #{tpu_custom_call.1} parent=15 // pred_region
          %p217 = scmp.lt.s32.totalorder %s20, 1
          %s218 = scalar_select %p217, %s20, 1
          %s219 = smul.addr %s218, 2
          %s220 = smul.addr %s219, 4
          %s221 = scalar_lea.vmem %s3, %s220
        $region32: #{tpu_custom_call.1} parent=15 // pred_fallthru
          _
      $region16: #{tpu_custom_call.1} parent=5 // pred_fallthru
        _
      %p222 = scmp.le.s32.totalorder 1, %s13
      %p223 = scmp.lt.s32.totalorder %s13, 3
      %p224 = pnand %p222, %p223
      %p225 = pneg %p224
      // Predicated region
      $region33: #{tpu_custom_call.1} parent=5 // pred_check
        _
      $region34: #{tpu_custom_call.1} parent=5 // pred_check_branch
        %227 = sbr.rel (%p224) target = $region36
      $region35: #{tpu_custom_call.1} parent=5 // pred_region
        %s228 = ssub.s32 %s13, 1
        %s229 = smul.u32 32, %s23
        %p230 = scmp.lt.s32.totalorder %s22, 1
        %s231 = scalar_select %p230, %s22, 1
        %p232 = scmp.lt.s32.totalorder %s229, 31
        %s233 = scalar_select %p232, %s229, 31
        %s234 = smul.addr %s231, 32
        %s235 = sadd.s32 %s233, %s234
        %s236 = smul.addr %s235, 8
        %s237 = scalar_lea.vmem %s0, %s236
        %p238 = pneg %p53
        %p239 = pneg %p50
        %s240 = smul.u32 32, %s23
        %p241 = scmp.lt.s32.totalorder %s22, 1
        %s242 = scalar_select %p241, %s22, 1
        %p243 = scmp.lt.s32.totalorder %s240, 31
        %s244 = scalar_select %p243, %s240, 31
        %s245 = smul.addr %s242, 32
        %s246 = sadd.s32 %s244, %s245
        %s247 = smul.addr %s246, 8
        %s248 = scalar_lea.vmem %s1, %s247
        %p249 = pneg %p81
        %p250 = pneg %p78
        %p251 = scmp.lt.s32.totalorder %s22, 1
        %s252 = scalar_select %p251, %s22, 1
        %s253 = smul.addr %s252, 2
        %s254 = smul.addr %s253, 4
        %s255 = scalar_lea.vmem %s2, %s254
        %p256 = pneg %p107
        %p257 = pneg %p104
        %p258 = scmp.lt.s32.totalorder %s22, 1
        %s259 = scalar_select %p258, %s22, 1
        %s260 = smul.addr %s259, 2
        %s261 = smul.addr %s260, 4
        %s262 = scalar_lea.vmem %s3, %s261
        %p263 = pneg %p133
        %p264 = pneg %p130
        %p265 = pneg %p161
        %p266 = pneg %p158
        %s267 = sand.u32 %s148, 1
        %s268 = scalar_lea.sflag [#allocation3], %s267
        %s269 = sand.u32 %s148, 1
        %s270 = smul.addr %s269, 8
        %s271 = scalar_lea.vmem [#allocation2], %s270
        %s272 = smul.u32 32, %s23
        %p273 = scmp.lt.s32.totalorder %s22, 1
        %s274 = scalar_select %p273, %s22, 1
        %p275 = scmp.lt.s32.totalorder %s272, 31
        %s276 = scalar_select %p275, %s272, 31
        %s277 = smul.addr %s274, 32
        %s278 = sadd.s32 %s276, %s277
        %s279 = smul.addr %s278, 8
        %s280 = scalar_lea.vmem %s0, %s279
        %s281 = smul.u32 32, %s23
        %s282 = smul.u32 32, %s23
        %p283 = scmp.lt.s32.totalorder %s22, 1
        %s284 = scalar_select %p283, %s22, 1
        %p285 = scmp.lt.s32.totalorder %s282, 31
        %s286 = scalar_select %p285, %s282, 31
        %s287 = smul.addr %s284, 32
        %s288 = sadd.s32 %s286, %s287
        %s289 = smul.addr %s288, 8
        %s290 = scalar_lea.vmem %s1, %s289
        %s291 = smul.u32 32, %s23
        %p292 = scmp.lt.s32.totalorder %s22, 1
        %s293 = scalar_select %p292, %s22, 1
        %s294 = smul.addr %s293, 2
        %s295 = smul.addr %s294, 4
        %s296 = scalar_lea.vmem %s2, %s295
        %p297 = scmp.lt.s32.totalorder %s22, 1
        %s298 = scalar_select %p297, %s22, 1
        %s299 = smul.addr %s298, 2
        %s300 = smul.addr %s299, 4
        %s301 = scalar_lea.vmem %s3, %s300
        %v302 = vld [vmem:[%s280] sm:$0xff]
        %v303 = vld [vmem:[%s280 + $0x8] sm:$0xff]
        %v304 = vld [vmem:[%s280 + $0x10] sm:$0xff]
        %v305 = vld [vmem:[%s280 + $0x18] sm:$0xff]
        %v306 = vld [vmem:[%s280 + $0x20] sm:$0xff]
        %v307 = vld [vmem:[%s280 + $0x28] sm:$0xff]
        %v308 = vld [vmem:[%s280 + $0x30] sm:$0xff]
        %v309 = vld [vmem:[%s280 + $0x38] sm:$0xff]
        %v310 = vld [vmem:[%s280 + $0x40] sm:$0xff]
        %v311 = vld [vmem:[%s280 + $0x48] sm:$0xff]
        %v312 = vld [vmem:[%s280 + $0x50] sm:$0xff]
        %v313 = vld [vmem:[%s280 + $0x58] sm:$0xff]
        %v314 = vld [vmem:[%s280 + $0x60] sm:$0xff]
        %v315 = vld [vmem:[%s280 + $0x68] sm:$0xff]
        %v316 = vld [vmem:[%s280 + $0x70] sm:$0xff]
        %v317 = vld [vmem:[%s280 + $0x78] sm:$0xff]
        %v318 = vld [vmem:[%s280 + $0x80] sm:$0xff]
        %v319 = vld [vmem:[%s280 + $0x88] sm:$0xff]
        %v320 = vld [vmem:[%s280 + $0x90] sm:$0xff]
        %v321 = vld [vmem:[%s280 + $0x98] sm:$0xff]
        %v322 = vld [vmem:[%s280 + $0xa0] sm:$0xff]
        %v323 = vld [vmem:[%s280 + $0xa8] sm:$0xff]
        %v324 = vld [vmem:[%s280 + $0xb0] sm:$0xff]
        %v325 = vld [vmem:[%s280 + $0xb8] sm:$0xff]
        %v326 = vld [vmem:[%s280 + $0xc0] sm:$0xff]
        %v327 = vld [vmem:[%s280 + $0xc8] sm:$0xff]
        %v328 = vld [vmem:[%s280 + $0xd0] sm:$0xff]
        %v329 = vld [vmem:[%s280 + $0xd8] sm:$0xff]
        %v330 = vld [vmem:[%s280 + $0xe0] sm:$0xff]
        %v331 = vld [vmem:[%s280 + $0xe8] sm:$0xff]
        %v332 = vld [vmem:[%s280 + $0xf0] sm:$0xff]
        %v333 = vld [vmem:[%s280 + $0xf8] sm:$0xff]
        %v334 = vld [vmem:[%s290] sm:$0xff]
        %v335 = vld [vmem:[%s290 + $0x8] sm:$0xff]
        %v336 = vld [vmem:[%s290 + $0x10] sm:$0xff]
        %v337 = vld [vmem:[%s290 + $0x18] sm:$0xff]
        %v338 = vld [vmem:[%s290 + $0x20] sm:$0xff]
        %v339 = vld [vmem:[%s290 + $0x28] sm:$0xff]
        %v340 = vld [vmem:[%s290 + $0x30] sm:$0xff]
        %v341 = vld [vmem:[%s290 + $0x38] sm:$0xff]
        %v342 = vld [vmem:[%s290 + $0x40] sm:$0xff]
        %v343 = vld [vmem:[%s290 + $0x48] sm:$0xff]
        %v344 = vld [vmem:[%s290 + $0x50] sm:$0xff]
        %v345 = vld [vmem:[%s290 + $0x58] sm:$0xff]
        %v346 = vld [vmem:[%s290 + $0x60] sm:$0xff]
        %v347 = vld [vmem:[%s290 + $0x68] sm:$0xff]
        %v348 = vld [vmem:[%s290 + $0x70] sm:$0xff]
        %v349 = vld [vmem:[%s290 + $0x78] sm:$0xff]
        %v350 = vld [vmem:[%s290 + $0x80] sm:$0xff]
        %v351 = vld [vmem:[%s290 + $0x88] sm:$0xff]
        %v352 = vld [vmem:[%s290 + $0x90] sm:$0xff]
        %v353 = vld [vmem:[%s290 + $0x98] sm:$0xff]
        %v354 = vld [vmem:[%s290 + $0xa0] sm:$0xff]
        %v355 = vld [vmem:[%s290 + $0xa8] sm:$0xff]
        %v356 = vld [vmem:[%s290 + $0xb0] sm:$0xff]
        %v357 = vld [vmem:[%s290 + $0xb8] sm:$0xff]
        %v358 = vld [vmem:[%s290 + $0xc0] sm:$0xff]
        %v359 = vld [vmem:[%s290 + $0xc8] sm:$0xff]
        %v360 = vld [vmem:[%s290 + $0xd0] sm:$0xff]
        %v361 = vld [vmem:[%s290 + $0xd8] sm:$0xff]
        %v362 = vld [vmem:[%s290 + $0xe0] sm:$0xff]
        %v363 = vld [vmem:[%s290 + $0xe8] sm:$0xff]
        %v364 = vld [vmem:[%s290 + $0xf0] sm:$0xff]
        %v365 = vld [vmem:[%s290 + $0xf8] sm:$0xff]
        %v366 = vld [vmem:[%s296] sm:$0xff]
        %v367 = vld [vmem:[%s301] sm:$0xff]
        %369 = vst [vmem:[#allocation1] ss:$2 sm:$0xff] %v366
        %v370 = vld.sshfl [vmem:[#allocation1] sm:$0xff pattern:$0x75316420]
        %v371 = vld.sshfl [vmem:[#allocation1 + $0x8] sm:$0xff pattern:$0x75316420]
        %vm372 = vcmask 31744
        %v374 = vsel %vm372, %v302, 0
        %v377 = vsel %vm372, %v303, 0
        %v380 = vsel %vm372, %v304, 0
        %v383 = vsel %vm372, %v305, 0
        %v386 = vsel %vm372, %v306, 0
        %v389 = vsel %vm372, %v307, 0
        %v392 = vsel %vm372, %v308, 0
        %v395 = vsel %vm372, %v309, 0
        %v398 = vsel %vm372, %v310, 0
        %v401 = vsel %vm372, %v311, 0
        %v404 = vsel %vm372, %v312, 0
        %v407 = vsel %vm372, %v313, 0
        %v410 = vsel %vm372, %v314, 0
        %v413 = vsel %vm372, %v315, 0
        %v416 = vsel %vm372, %v316, 0
        %v419 = vsel %vm372, %v317, 0
        %v422 = vsel %vm372, %v318, 0
        %v425 = vsel %vm372, %v319, 0
        %v428 = vsel %vm372, %v320, 0
        %v431 = vsel %vm372, %v321, 0
        %v434 = vsel %vm372, %v322, 0
        %v437 = vsel %vm372, %v323, 0
        %v440 = vsel %vm372, %v324, 0
        %v443 = vsel %vm372, %v325, 0
        %v446 = vsel %vm372, %v326, 0
        %v449 = vsel %vm372, %v327, 0
        %v452 = vsel %vm372, %v328, 0
        %v455 = vsel %vm372, %v329, 0
        %v458 = vsel %vm372, %v330, 0
        %v461 = vsel %vm372, %v331, 0
        %v464 = vsel %vm372, %v332, 0
        %v467 = vsel %vm372, %v333, 0
        %vm469 = vcmask 1043456
        %v470 = vsel %vm469, %v370, 0
        %v472 = vsel %vm469, %v371, 0
        %474 = vmatpush.msra.mxu0 0.0
        %475 = vmatpush.msra.mxu0 0.0
        %476 = vmatpush.msra.mxu0 0.0
        %477 = vmatpush.msra.mxu0 0.0
        %478 = vmatpush.msra.mxu0 0.0
        %479 = vmatpush.msra.mxu0 0.0
        %480 = vmatpush.msra.mxu0 0.0
        %481 = vmatpush.msra.mxu0 0.0
        %482 = vmatpush.msra.mxu0 0.0
        %483 = vmatpush.msra.mxu0 0.0
        %484 = vmatpush.msra.mxu0 0.0
        %485 = vmatpush.msra.mxu0 0.0
        %486 = vmatpush.msra.mxu0 0.0
        %487 = vmatpush.msra.mxu0 0.0
        %488 = vmatpush.msra.mxu0 0.0
        %489 = vmatpush.msra.mxu0 %v470
        %490 = vmatmul.f32.gmra.mxu0 %v374
        %v491 = vpop.f32.mrf.mxu0
        %v492 = vadd.f32 0.0, %v491
        %493 = vmatmul.f32.gmra.mxu0 %v377
        %v494 = vpop.f32.mrf.mxu0
        %v495 = vadd.f32 0.0, %v494
        %496 = vmatmul.f32.gmra.mxu0 %v380
        %v497 = vpop.f32.mrf.mxu0
        %v498 = vadd.f32 0.0, %v497
        %499 = vmatmul.f32.gmra.mxu0 %v383
        %v500 = vpop.f32.mrf.mxu0
        %v501 = vadd.f32 0.0, %v500
        %502 = vmatmul.f32.gmra.mxu0 %v386
        %v503 = vpop.f32.mrf.mxu0
        %v504 = vadd.f32 0.0, %v503
        %505 = vmatmul.f32.gmra.mxu0 %v389
        %v506 = vpop.f32.mrf.mxu0
        %v507 = vadd.f32 0.0, %v506
        %508 = vmatmul.f32.gmra.mxu0 %v392
        %v509 = vpop.f32.mrf.mxu0
        %v510 = vadd.f32 0.0, %v509
        %511 = vmatmul.f32.gmra.mxu0 %v395
        %v512 = vpop.f32.mrf.mxu0
        %v513 = vadd.f32 0.0, %v512
        %514 = vmatmul.f32.gmra.mxu0 %v398
        %v515 = vpop.f32.mrf.mxu0
        %v516 = vadd.f32 0.0, %v515
        %517 = vmatmul.f32.gmra.mxu0 %v401
        %v518 = vpop.f32.mrf.mxu0
        %v519 = vadd.f32 0.0, %v518
        %520 = vmatmul.f32.gmra.mxu0 %v404
        %v521 = vpop.f32.mrf.mxu0
        %v522 = vadd.f32 0.0, %v521
        %523 = vmatmul.f32.gmra.mxu0 %v407
        %v524 = vpop.f32.mrf.mxu0
        %v525 = vadd.f32 0.0, %v524
        %526 = vmatmul.f32.gmra.mxu0 %v410
        %v527 = vpop.f32.mrf.mxu0
        %v528 = vadd.f32 0.0, %v527
        %529 = vmatmul.f32.gmra.mxu0 %v413
        %v530 = vpop.f32.mrf.mxu0
        %v531 = vadd.f32 0.0, %v530
        %532 = vmatmul.f32.gmra.mxu0 %v416
        %v533 = vpop.f32.mrf.mxu0
        %v534 = vadd.f32 0.0, %v533
        %535 = vmatmul.f32.gmra.mxu0 %v419
        %v536 = vpop.f32.mrf.mxu0
        %v537 = vadd.f32 0.0, %v536
        %538 = vmatmul.f32.gmra.mxu0 %v422
        %v539 = vpop.f32.mrf.mxu0
        %v540 = vadd.f32 0.0, %v539
        %541 = vmatmul.f32.gmra.mxu0 %v425
        %v542 = vpop.f32.mrf.mxu0
        %v543 = vadd.f32 0.0, %v542
        %544 = vmatmul.f32.gmra.mxu0 %v428
        %v545 = vpop.f32.mrf.mxu0
        %v546 = vadd.f32 0.0, %v545
        %547 = vmatmul.f32.gmra.mxu0 %v431
        %v548 = vpop.f32.mrf.mxu0
        %v549 = vadd.f32 0.0, %v548
        %550 = vmatmul.f32.gmra.mxu0 %v434
        %v551 = vpop.f32.mrf.mxu0
        %v552 = vadd.f32 0.0, %v551
        %553 = vmatmul.f32.gmra.mxu0 %v437
        %v554 = vpop.f32.mrf.mxu0
        %v555 = vadd.f32 0.0, %v554
        %556 = vmatmul.f32.gmra.mxu0 %v440
        %v557 = vpop.f32.mrf.mxu0
        %v558 = vadd.f32 0.0, %v557
        %559 = vmatmul.f32.gmra.mxu0 %v443
        %v560 = vpop.f32.mrf.mxu0
        %v561 = vadd.f32 0.0, %v560
        %562 = vmatmul.f32.gmra.mxu0 %v446
        %v563 = vpop.f32.mrf.mxu0
        %v564 = vadd.f32 0.0, %v563
        %565 = vmatmul.f32.gmra.mxu0 %v449
        %v566 = vpop.f32.mrf.mxu0
        %v567 = vadd.f32 0.0, %v566
        %568 = vmatmul.f32.gmra.mxu0 %v452
        %v569 = vpop.f32.mrf.mxu0
        %v570 = vadd.f32 0.0, %v569
        %571 = vmatmul.f32.gmra.mxu0 %v455
        %v572 = vpop.f32.mrf.mxu0
        %v573 = vadd.f32 0.0, %v572
        %574 = vmatmul.f32.gmra.mxu0 %v458
        %v575 = vpop.f32.mrf.mxu0
        %v576 = vadd.f32 0.0, %v575
        %577 = vmatmul.f32.gmra.mxu0 %v461
        %v578 = vpop.f32.mrf.mxu0
        %v579 = vadd.f32 0.0, %v578
        %580 = vmatmul.f32.gmra.mxu0 %v464
        %v581 = vpop.f32.mrf.mxu0
        %v582 = vadd.f32 0.0, %v581
        %583 = vmatmul.f32.gmra.mxu0 %v467
        %v584 = vpop.f32.mrf.mxu0
        %v585 = vadd.f32 0.0, %v584
        %586 = vdwg.mxu0
        %587 = vmatpush.msra.mxu0 0.0
        %588 = vmatpush.msra.mxu0 0.0
        %589 = vmatpush.msra.mxu0 0.0
        %590 = vmatpush.msra.mxu0 0.0
        %591 = vmatpush.msra.mxu0 0.0
        %592 = vmatpush.msra.mxu0 0.0
        %593 = vmatpush.msra.mxu0 0.0
        %594 = vmatpush.msra.mxu0 0.0
        %595 = vmatpush.msra.mxu0 0.0
        %596 = vmatpush.msra.mxu0 0.0
        %597 = vmatpush.msra.mxu0 0.0
        %598 = vmatpush.msra.mxu0 0.0
        %599 = vmatpush.msra.mxu0 0.0
        %600 = vmatpush.msra.mxu0 0.0
        %601 = vmatpush.msra.mxu0 0.0
        %602 = vmatpush.msra.mxu0 %v472
        %603 = vmatmul.f32.gmra.mxu0 %v374
        %v604 = vpop.f32.mrf.mxu0
        %v605 = vadd.f32 0.0, %v604
        %606 = vmatmul.f32.gmra.mxu0 %v377
        %v607 = vpop.f32.mrf.mxu0
        %v608 = vadd.f32 0.0, %v607
        %609 = vmatmul.f32.gmra.mxu0 %v380
        %v610 = vpop.f32.mrf.mxu0
        %v611 = vadd.f32 0.0, %v610
        %612 = vmatmul.f32.gmra.mxu0 %v383
        %v613 = vpop.f32.mrf.mxu0
        %v614 = vadd.f32 0.0, %v613
        %615 = vmatmul.f32.gmra.mxu0 %v386
        %v616 = vpop.f32.mrf.mxu0
        %v617 = vadd.f32 0.0, %v616
        %618 = vmatmul.f32.gmra.mxu0 %v389
        %v619 = vpop.f32.mrf.mxu0
        %v620 = vadd.f32 0.0, %v619
        %621 = vmatmul.f32.gmra.mxu0 %v392
        %v622 = vpop.f32.mrf.mxu0
        %v623 = vadd.f32 0.0, %v622
        %624 = vmatmul.f32.gmra.mxu0 %v395
        %v625 = vpop.f32.mrf.mxu0
        %v626 = vadd.f32 0.0, %v625
        %627 = vmatmul.f32.gmra.mxu0 %v398
        %v628 = vpop.f32.mrf.mxu0
        %v629 = vadd.f32 0.0, %v628
        %630 = vmatmul.f32.gmra.mxu0 %v401
        %v631 = vpop.f32.mrf.mxu0
        %v632 = vadd.f32 0.0, %v631
        %633 = vmatmul.f32.gmra.mxu0 %v404
        %v634 = vpop.f32.mrf.mxu0
        %v635 = vadd.f32 0.0, %v634
        %636 = vmatmul.f32.gmra.mxu0 %v407
        %v637 = vpop.f32.mrf.mxu0
        %v638 = vadd.f32 0.0, %v637
        %639 = vmatmul.f32.gmra.mxu0 %v410
        %v640 = vpop.f32.mrf.mxu0
        %v641 = vadd.f32 0.0, %v640
        %642 = vmatmul.f32.gmra.mxu0 %v413
        %v643 = vpop.f32.mrf.mxu0
        %v644 = vadd.f32 0.0, %v643
        %645 = vmatmul.f32.gmra.mxu0 %v416
        %v646 = vpop.f32.mrf.mxu0
        %v647 = vadd.f32 0.0, %v646
        %648 = vmatmul.f32.gmra.mxu0 %v419
        %v649 = vpop.f32.mrf.mxu0
        %v650 = vadd.f32 0.0, %v649
        %651 = vmatmul.f32.gmra.mxu0 %v422
        %v652 = vpop.f32.mrf.mxu0
        %v653 = vadd.f32 0.0, %v652
        %654 = vmatmul.f32.gmra.mxu0 %v425
        %v655 = vpop.f32.mrf.mxu0
        %v656 = vadd.f32 0.0, %v655
        %657 = vmatmul.f32.gmra.mxu0 %v428
        %v658 = vpop.f32.mrf.mxu0
        %v659 = vadd.f32 0.0, %v658
        %660 = vmatmul.f32.gmra.mxu0 %v431
        %v661 = vpop.f32.mrf.mxu0
        %v662 = vadd.f32 0.0, %v661
        %663 = vmatmul.f32.gmra.mxu0 %v434
        %v664 = vpop.f32.mrf.mxu0
        %v665 = vadd.f32 0.0, %v664
        %666 = vmatmul.f32.gmra.mxu0 %v437
        %v667 = vpop.f32.mrf.mxu0
        %v668 = vadd.f32 0.0, %v667
        %669 = vmatmul.f32.gmra.mxu0 %v440
        %v670 = vpop.f32.mrf.mxu0
        %v671 = vadd.f32 0.0, %v670
        %672 = vmatmul.f32.gmra.mxu0 %v443
        %v673 = vpop.f32.mrf.mxu0
        %v674 = vadd.f32 0.0, %v673
        %675 = vmatmul.f32.gmra.mxu0 %v446
        %v676 = vpop.f32.mrf.mxu0
        %v677 = vadd.f32 0.0, %v676
        %678 = vmatmul.f32.gmra.mxu0 %v449
        %v679 = vpop.f32.mrf.mxu0
        %v680 = vadd.f32 0.0, %v679
        %681 = vmatmul.f32.gmra.mxu0 %v452
        %v682 = vpop.f32.mrf.mxu0
        %v683 = vadd.f32 0.0, %v682
        %684 = vmatmul.f32.gmra.mxu0 %v455
        %v685 = vpop.f32.mrf.mxu0
        %v686 = vadd.f32 0.0, %v685
        %687 = vmatmul.f32.gmra.mxu0 %v458
        %v688 = vpop.f32.mrf.mxu0
        %v689 = vadd.f32 0.0, %v688
        %690 = vmatmul.f32.gmra.mxu0 %v461
        %v691 = vpop.f32.mrf.mxu0
        %v692 = vadd.f32 0.0, %v691
        %693 = vmatmul.f32.gmra.mxu0 %v464
        %v694 = vpop.f32.mrf.mxu0
        %v695 = vadd.f32 0.0, %v694
        %696 = vmatmul.f32.gmra.mxu0 %v467
        %v697 = vpop.f32.mrf.mxu0
        %v698 = vadd.f32 0.0, %v697
        %699 = vdwg.mxu0
        %701 = vst [vmem:[#allocation1] ss:$2 sm:$0xff] %v367
        %v702 = vld.sshfl [vmem:[#allocation1] sm:$0xff pattern:$0x75316420]
        %v703 = vld.sshfl [vmem:[#allocation1 + $0x8] sm:$0xff pattern:$0x75316420]
        %v705 = vsel %vm372, %v334, 0
        %v708 = vsel %vm372, %v335, 0
        %v711 = vsel %vm372, %v336, 0
        %v714 = vsel %vm372, %v337, 0
        %v717 = vsel %vm372, %v338, 0
        %v720 = vsel %vm372, %v339, 0
        %v723 = vsel %vm372, %v340, 0
        %v726 = vsel %vm372, %v341, 0
        %v729 = vsel %vm372, %v342, 0
        %v732 = vsel %vm372, %v343, 0
        %v735 = vsel %vm372, %v344, 0
        %v738 = vsel %vm372, %v345, 0
        %v741 = vsel %vm372, %v346, 0
        %v744 = vsel %vm372, %v347, 0
        %v747 = vsel %vm372, %v348, 0
        %v750 = vsel %vm372, %v349, 0
        %v753 = vsel %vm372, %v350, 0
        %v756 = vsel %vm372, %v351, 0
        %v759 = vsel %vm372, %v352, 0
        %v762 = vsel %vm372, %v353, 0
        %v765 = vsel %vm372, %v354, 0
        %v768 = vsel %vm372, %v355, 0
        %v771 = vsel %vm372, %v356, 0
        %v774 = vsel %vm372, %v357, 0
        %v777 = vsel %vm372, %v358, 0
        %v780 = vsel %vm372, %v359, 0
        %v783 = vsel %vm372, %v360, 0
        %v786 = vsel %vm372, %v361, 0
        %v789 = vsel %vm372, %v362, 0
        %v792 = vsel %vm372, %v363, 0
        %v795 = vsel %vm372, %v364, 0
        %v798 = vsel %vm372, %v365, 0
        %v800 = vsel %vm469, %v702, 0
        %v802 = vsel %vm469, %v703, 0
        %804 = vmatpush.msra.mxu0 0.0
        %805 = vmatpush.msra.mxu0 0.0
        %806 = vmatpush.msra.mxu0 0.0
        %807 = vmatpush.msra.mxu0 0.0
        %808 = vmatpush.msra.mxu0 0.0
        %809 = vmatpush.msra.mxu0 0.0
        %810 = vmatpush.msra.mxu0 0.0
        %811 = vmatpush.msra.mxu0 0.0
        %812 = vmatpush.msra.mxu0 0.0
        %813 = vmatpush.msra.mxu0 0.0
        %814 = vmatpush.msra.mxu0 0.0
        %815 = vmatpush.msra.mxu0 0.0
        %816 = vmatpush.msra.mxu0 0.0
        %817 = vmatpush.msra.mxu0 0.0
        %818 = vmatpush.msra.mxu0 0.0
        %819 = vmatpush.msra.mxu0 %v800
        %820 = vmatmul.f32.gmra.mxu0 %v705
        %v821 = vpop.f32.mrf.mxu0
        %v822 = vadd.f32 0.0, %v821
        %823 = vmatmul.f32.gmra.mxu0 %v708
        %v824 = vpop.f32.mrf.mxu0
        %v825 = vadd.f32 0.0, %v824
        %826 = vmatmul.f32.gmra.mxu0 %v711
        %v827 = vpop.f32.mrf.mxu0
        %v828 = vadd.f32 0.0, %v827
        %829 = vmatmul.f32.gmra.mxu0 %v714
        %v830 = vpop.f32.mrf.mxu0
        %v831 = vadd.f32 0.0, %v830
        %832 = vmatmul.f32.gmra.mxu0 %v717
        %v833 = vpop.f32.mrf.mxu0
        %v834 = vadd.f32 0.0, %v833
        %835 = vmatmul.f32.gmra.mxu0 %v720
        %v836 = vpop.f32.mrf.mxu0
        %v837 = vadd.f32 0.0, %v836
        %838 = vmatmul.f32.gmra.mxu0 %v723
        %v839 = vpop.f32.mrf.mxu0
        %v840 = vadd.f32 0.0, %v839
        %841 = vmatmul.f32.gmra.mxu0 %v726
        %v842 = vpop.f32.mrf.mxu0
        %v843 = vadd.f32 0.0, %v842
        %844 = vmatmul.f32.gmra.mxu0 %v729
        %v845 = vpop.f32.mrf.mxu0
        %v846 = vadd.f32 0.0, %v845
        %847 = vmatmul.f32.gmra.mxu0 %v732
        %v848 = vpop.f32.mrf.mxu0
        %v849 = vadd.f32 0.0, %v848
        %850 = vmatmul.f32.gmra.mxu0 %v735
        %v851 = vpop.f32.mrf.mxu0
        %v852 = vadd.f32 0.0, %v851
        %853 = vmatmul.f32.gmra.mxu0 %v738
        %v854 = vpop.f32.mrf.mxu0
        %v855 = vadd.f32 0.0, %v854
        %856 = vmatmul.f32.gmra.mxu0 %v741
        %v857 = vpop.f32.mrf.mxu0
        %v858 = vadd.f32 0.0, %v857
        %859 = vmatmul.f32.gmra.mxu0 %v744
        %v860 = vpop.f32.mrf.mxu0
        %v861 = vadd.f32 0.0, %v860
        %862 = vmatmul.f32.gmra.mxu0 %v747
        %v863 = vpop.f32.mrf.mxu0
        %v864 = vadd.f32 0.0, %v863
        %865 = vmatmul.f32.gmra.mxu0 %v750
        %v866 = vpop.f32.mrf.mxu0
        %v867 = vadd.f32 0.0, %v866
        %868 = vmatmul.f32.gmra.mxu0 %v753
        %v869 = vpop.f32.mrf.mxu0
        %v870 = vadd.f32 0.0, %v869
        %871 = vmatmul.f32.gmra.mxu0 %v756
        %v872 = vpop.f32.mrf.mxu0
        %v873 = vadd.f32 0.0, %v872
        %874 = vmatmul.f32.gmra.mxu0 %v759
        %v875 = vpop.f32.mrf.mxu0
        %v876 = vadd.f32 0.0, %v875
        %877 = vmatmul.f32.gmra.mxu0 %v762
        %v878 = vpop.f32.mrf.mxu0
        %v879 = vadd.f32 0.0, %v878
        %880 = vmatmul.f32.gmra.mxu0 %v765
        %v881 = vpop.f32.mrf.mxu0
        %v882 = vadd.f32 0.0, %v881
        %883 = vmatmul.f32.gmra.mxu0 %v768
        %v884 = vpop.f32.mrf.mxu0
        %v885 = vadd.f32 0.0, %v884
        %886 = vmatmul.f32.gmra.mxu0 %v771
        %v887 = vpop.f32.mrf.mxu0
        %v888 = vadd.f32 0.0, %v887
        %889 = vmatmul.f32.gmra.mxu0 %v774
        %v890 = vpop.f32.mrf.mxu0
        %v891 = vadd.f32 0.0, %v890
        %892 = vmatmul.f32.gmra.mxu0 %v777
        %v893 = vpop.f32.mrf.mxu0
        %v894 = vadd.f32 0.0, %v893
        %895 = vmatmul.f32.gmra.mxu0 %v780
        %v896 = vpop.f32.mrf.mxu0
        %v897 = vadd.f32 0.0, %v896
        %898 = vmatmul.f32.gmra.mxu0 %v783
        %v899 = vpop.f32.mrf.mxu0
        %v900 = vadd.f32 0.0, %v899
        %901 = vmatmul.f32.gmra.mxu0 %v786
        %v902 = vpop.f32.mrf.mxu0
        %v903 = vadd.f32 0.0, %v902
        %904 = vmatmul.f32.gmra.mxu0 %v789
        %v905 = vpop.f32.mrf.mxu0
        %v906 = vadd.f32 0.0, %v905
        %907 = vmatmul.f32.gmra.mxu0 %v792
        %v908 = vpop.f32.mrf.mxu0
        %v909 = vadd.f32 0.0, %v908
        %910 = vmatmul.f32.gmra.mxu0 %v795
        %v911 = vpop.f32.mrf.mxu0
        %v912 = vadd.f32 0.0, %v911
        %913 = vmatmul.f32.gmra.mxu0 %v798
        %v914 = vpop.f32.mrf.mxu0
        %v915 = vadd.f32 0.0, %v914
        %916 = vdwg.mxu0
        %917 = vmatpush.msra.mxu0 0.0
        %918 = vmatpush.msra.mxu0 0.0
        %919 = vmatpush.msra.mxu0 0.0
        %920 = vmatpush.msra.mxu0 0.0
        %921 = vmatpush.msra.mxu0 0.0
        %922 = vmatpush.msra.mxu0 0.0
        %923 = vmatpush.msra.mxu0 0.0
        %924 = vmatpush.msra.mxu0 0.0
        %925 = vmatpush.msra.mxu0 0.0
        %926 = vmatpush.msra.mxu0 0.0
        %927 = vmatpush.msra.mxu0 0.0
        %928 = vmatpush.msra.mxu0 0.0
        %929 = vmatpush.msra.mxu0 0.0
        %930 = vmatpush.msra.mxu0 0.0
        %931 = vmatpush.msra.mxu0 0.0
        %932 = vmatpush.msra.mxu0 %v802
        %933 = vmatmul.f32.gmra.mxu0 %v705
        %v934 = vpop.f32.mrf.mxu0
        %v935 = vadd.f32 0.0, %v934
        %936 = vmatmul.f32.gmra.mxu0 %v708
        %v937 = vpop.f32.mrf.mxu0
        %v938 = vadd.f32 0.0, %v937
        %939 = vmatmul.f32.gmra.mxu0 %v711
        %v940 = vpop.f32.mrf.mxu0
        %v941 = vadd.f32 0.0, %v940
        %942 = vmatmul.f32.gmra.mxu0 %v714
        %v943 = vpop.f32.mrf.mxu0
        %v944 = vadd.f32 0.0, %v943
        %945 = vmatmul.f32.gmra.mxu0 %v717
        %v946 = vpop.f32.mrf.mxu0
        %v947 = vadd.f32 0.0, %v946
        %948 = vmatmul.f32.gmra.mxu0 %v720
        %v949 = vpop.f32.mrf.mxu0
        %v950 = vadd.f32 0.0, %v949
        %951 = vmatmul.f32.gmra.mxu0 %v723
        %v952 = vpop.f32.mrf.mxu0
        %v953 = vadd.f32 0.0, %v952
        %954 = vmatmul.f32.gmra.mxu0 %v726
        %v955 = vpop.f32.mrf.mxu0
        %v956 = vadd.f32 0.0, %v955
        %957 = vmatmul.f32.gmra.mxu0 %v729
        %v958 = vpop.f32.mrf.mxu0
        %v959 = vadd.f32 0.0, %v958
        %960 = vmatmul.f32.gmra.mxu0 %v732
        %v961 = vpop.f32.mrf.mxu0
        %v962 = vadd.f32 0.0, %v961
        %963 = vmatmul.f32.gmra.mxu0 %v735
        %v964 = vpop.f32.mrf.mxu0
        %v965 = vadd.f32 0.0, %v964
        %966 = vmatmul.f32.gmra.mxu0 %v738
        %v967 = vpop.f32.mrf.mxu0
        %v968 = vadd.f32 0.0, %v967
        %969 = vmatmul.f32.gmra.mxu0 %v741
        %v970 = vpop.f32.mrf.mxu0
        %v971 = vadd.f32 0.0, %v970
        %972 = vmatmul.f32.gmra.mxu0 %v744
        %v973 = vpop.f32.mrf.mxu0
        %v974 = vadd.f32 0.0, %v973
        %975 = vmatmul.f32.gmra.mxu0 %v747
        %v976 = vpop.f32.mrf.mxu0
        %v977 = vadd.f32 0.0, %v976
        %978 = vmatmul.f32.gmra.mxu0 %v750
        %v979 = vpop.f32.mrf.mxu0
        %v980 = vadd.f32 0.0, %v979
        %981 = vmatmul.f32.gmra.mxu0 %v753
        %v982 = vpop.f32.mrf.mxu0
        %v983 = vadd.f32 0.0, %v982
        %984 = vmatmul.f32.gmra.mxu0 %v756
        %v985 = vpop.f32.mrf.mxu0
        %v986 = vadd.f32 0.0, %v985
        %987 = vmatmul.f32.gmra.mxu0 %v759
        %v988 = vpop.f32.mrf.mxu0
        %v989 = vadd.f32 0.0, %v988
        %990 = vmatmul.f32.gmra.mxu0 %v762
        %v991 = vpop.f32.mrf.mxu0
        %v992 = vadd.f32 0.0, %v991
        %993 = vmatmul.f32.gmra.mxu0 %v765
        %v994 = vpop.f32.mrf.mxu0
        %v995 = vadd.f32 0.0, %v994
        %996 = vmatmul.f32.gmra.mxu0 %v768
        %v997 = vpop.f32.mrf.mxu0
        %v998 = vadd.f32 0.0, %v997
        %999 = vmatmul.f32.gmra.mxu0 %v771
        %v1000 = vpop.f32.mrf.mxu0
        %v1001 = vadd.f32 0.0, %v1000
        %1002 = vmatmul.f32.gmra.mxu0 %v774
        %v1003 = vpop.f32.mrf.mxu0
        %v1004 = vadd.f32 0.0, %v1003
        %1005 = vmatmul.f32.gmra.mxu0 %v777
        %v1006 = vpop.f32.mrf.mxu0
        %v1007 = vadd.f32 0.0, %v1006
        %1008 = vmatmul.f32.gmra.mxu0 %v780
        %v1009 = vpop.f32.mrf.mxu0
        %v1010 = vadd.f32 0.0, %v1009
        %1011 = vmatmul.f32.gmra.mxu0 %v783
        %v1012 = vpop.f32.mrf.mxu0
        %v1013 = vadd.f32 0.0, %v1012
        %1014 = vmatmul.f32.gmra.mxu0 %v786
        %v1015 = vpop.f32.mrf.mxu0
        %v1016 = vadd.f32 0.0, %v1015
        %1017 = vmatmul.f32.gmra.mxu0 %v789
        %v1018 = vpop.f32.mrf.mxu0
        %v1019 = vadd.f32 0.0, %v1018
        %1020 = vmatmul.f32.gmra.mxu0 %v792
        %v1021 = vpop.f32.mrf.mxu0
        %v1022 = vadd.f32 0.0, %v1021
        %1023 = vmatmul.f32.gmra.mxu0 %v795
        %v1024 = vpop.f32.mrf.mxu0
        %v1025 = vadd.f32 0.0, %v1024
        %1026 = vmatmul.f32.gmra.mxu0 %v798
        %v1027 = vpop.f32.mrf.mxu0
        %v1028 = vadd.f32 0.0, %v1027
        %1029 = vdwg.mxu0
        %v1030 = vmul.f32 %v492, %v492
        %v1031 = vmul.f32 %v605, %v605
        %v1032 = vmul.f32 %v495, %v495
        %v1033 = vmul.f32 %v608, %v608
        %v1034 = vmul.f32 %v498, %v498
        %v1035 = vmul.f32 %v611, %v611
        %v1036 = vmul.f32 %v501, %v501
        %v1037 = vmul.f32 %v614, %v614
        %v1038 = vmul.f32 %v504, %v504
        %v1039 = vmul.f32 %v617, %v617
        %v1040 = vmul.f32 %v507, %v507
        %v1041 = vmul.f32 %v620, %v620
        %v1042 = vmul.f32 %v510, %v510
        %v1043 = vmul.f32 %v623, %v623
        %v1044 = vmul.f32 %v513, %v513
        %v1045 = vmul.f32 %v626, %v626
        %v1046 = vmul.f32 %v516, %v516
        %v1047 = vmul.f32 %v629, %v629
        %v1048 = vmul.f32 %v519, %v519
        %v1049 = vmul.f32 %v632, %v632
        %v1050 = vmul.f32 %v522, %v522
        %v1051 = vmul.f32 %v635, %v635
        %v1052 = vmul.f32 %v525, %v525
        %v1053 = vmul.f32 %v638, %v638
        %v1054 = vmul.f32 %v528, %v528
        %v1055 = vmul.f32 %v641, %v641
        %v1056 = vmul.f32 %v531, %v531
        %v1057 = vmul.f32 %v644, %v644
        %v1058 = vmul.f32 %v534, %v534
        %v1059 = vmul.f32 %v647, %v647
        %v1060 = vmul.f32 %v537, %v537
        %v1061 = vmul.f32 %v650, %v650
        %v1062 = vmul.f32 %v540, %v540
        %v1063 = vmul.f32 %v653, %v653
        %v1064 = vmul.f32 %v543, %v543
        %v1065 = vmul.f32 %v656, %v656
        %v1066 = vmul.f32 %v546, %v546
        %v1067 = vmul.f32 %v659, %v659
        %v1068 = vmul.f32 %v549, %v549
        %v1069 = vmul.f32 %v662, %v662
        %v1070 = vmul.f32 %v552, %v552
        %v1071 = vmul.f32 %v665, %v665
        %v1072 = vmul.f32 %v555, %v555
        %v1073 = vmul.f32 %v668, %v668
        %v1074 = vmul.f32 %v558, %v558
        %v1075 = vmul.f32 %v671, %v671
        %v1076 = vmul.f32 %v561, %v561
        %v1077 = vmul.f32 %v674, %v674
        %v1078 = vmul.f32 %v564, %v564
        %v1079 = vmul.f32 %v677, %v677
        %v1080 = vmul.f32 %v567, %v567
        %v1081 = vmul.f32 %v680, %v680
        %v1082 = vmul.f32 %v570, %v570
        %v1083 = vmul.f32 %v683, %v683
        %v1084 = vmul.f32 %v573, %v573
        %v1085 = vmul.f32 %v686, %v686
        %v1086 = vmul.f32 %v576, %v576
        %v1087 = vmul.f32 %v689, %v689
        %v1088 = vmul.f32 %v579, %v579
        %v1089 = vmul.f32 %v692, %v692
        %v1090 = vmul.f32 %v582, %v582
        %v1091 = vmul.f32 %v695, %v695
        %v1092 = vmul.f32 %v585, %v585
        %v1093 = vmul.f32 %v698, %v698
        %v1094 = vadd.f32 %v1030, %v1031
        %1095 = vadd.xlane.f32.xlu0 %v1094
        %v1096 = vpop.xlane.xlu0 %1095
        %v1097 = vadd.f32 %v1032, %v1033
        %1098 = vadd.xlane.f32.xlu0 %v1097
        %v1099 = vpop.xlane.xlu0 %1098
        %v1100 = vadd.f32 %v1034, %v1035
        %1101 = vadd.xlane.f32.xlu0 %v1100
        %v1102 = vpop.xlane.xlu0 %1101
        %v1103 = vadd.f32 %v1036, %v1037
        %1104 = vadd.xlane.f32.xlu0 %v1103
        %v1105 = vpop.xlane.xlu0 %1104
        %v1106 = vadd.f32 %v1038, %v1039
        %1107 = vadd.xlane.f32.xlu0 %v1106
        %v1108 = vpop.xlane.xlu0 %1107
        %v1109 = vadd.f32 %v1040, %v1041
        %1110 = vadd.xlane.f32.xlu0 %v1109
        %v1111 = vpop.xlane.xlu0 %1110
        %v1112 = vadd.f32 %v1042, %v1043
        %1113 = vadd.xlane.f32.xlu0 %v1112
        %v1114 = vpop.xlane.xlu0 %1113
        %v1115 = vadd.f32 %v1044, %v1045
        %1116 = vadd.xlane.f32.xlu0 %v1115
        %v1117 = vpop.xlane.xlu0 %1116
        %v1118 = vadd.f32 %v1046, %v1047
        %1119 = vadd.xlane.f32.xlu0 %v1118
        %v1120 = vpop.xlane.xlu0 %1119
        %v1121 = vadd.f32 %v1048, %v1049
        %1122 = vadd.xlane.f32.xlu0 %v1121
        %v1123 = vpop.xlane.xlu0 %1122
        %v1124 = vadd.f32 %v1050, %v1051
        %1125 = vadd.xlane.f32.xlu0 %v1124
        %v1126 = vpop.xlane.xlu0 %1125
        %v1127 = vadd.f32 %v1052, %v1053
        %1128 = vadd.xlane.f32.xlu0 %v1127
        %v1129 = vpop.xlane.xlu0 %1128
        %v1130 = vadd.f32 %v1054, %v1055
        %1131 = vadd.xlane.f32.xlu0 %v1130
        %v1132 = vpop.xlane.xlu0 %1131
        %v1133 = vadd.f32 %v1056, %v1057
        %1134 = vadd.xlane.f32.xlu0 %v1133
        %v1135 = vpop.xlane.xlu0 %1134
        %v1136 = vadd.f32 %v1058, %v1059
        %1137 = vadd.xlane.f32.xlu0 %v1136
        %v1138 = vpop.xlane.xlu0 %1137
        %v1139 = vadd.f32 %v1060, %v1061
        %1140 = vadd.xlane.f32.xlu0 %v1139
        %v1141 = vpop.xlane.xlu0 %1140
        %v1142 = vadd.f32 %v1062, %v1063
        %1143 = vadd.xlane.f32.xlu0 %v1142
        %v1144 = vpop.xlane.xlu0 %1143
        %v1145 = vadd.f32 %v1064, %v1065
        %1146 = vadd.xlane.f32.xlu0 %v1145
        %v1147 = vpop.xlane.xlu0 %1146
        %v1148 = vadd.f32 %v1066, %v1067
        %1149 = vadd.xlane.f32.xlu0 %v1148
        %v1150 = vpop.xlane.xlu0 %1149
        %v1151 = vadd.f32 %v1068, %v1069
        %1152 = vadd.xlane.f32.xlu0 %v1151
        %v1153 = vpop.xlane.xlu0 %1152
        %v1154 = vadd.f32 %v1070, %v1071
        %1155 = vadd.xlane.f32.xlu0 %v1154
        %v1156 = vpop.xlane.xlu0 %1155
        %v1157 = vadd.f32 %v1072, %v1073
        %1158 = vadd.xlane.f32.xlu0 %v1157
        %v1159 = vpop.xlane.xlu0 %1158
        %v1160 = vadd.f32 %v1074, %v1075
        %1161 = vadd.xlane.f32.xlu0 %v1160
        %v1162 = vpop.xlane.xlu0 %1161
        %v1163 = vadd.f32 %v1076, %v1077
        %1164 = vadd.xlane.f32.xlu0 %v1163
        %v1165 = vpop.xlane.xlu0 %1164
        %v1166 = vadd.f32 %v1078, %v1079
        %1167 = vadd.xlane.f32.xlu0 %v1166
        %v1168 = vpop.xlane.xlu0 %1167
        %v1169 = vadd.f32 %v1080, %v1081
        %1170 = vadd.xlane.f32.xlu0 %v1169
        %v1171 = vpop.xlane.xlu0 %1170
        %v1172 = vadd.f32 %v1082, %v1083
        %1173 = vadd.xlane.f32.xlu0 %v1172
        %v1174 = vpop.xlane.xlu0 %1173
        %v1175 = vadd.f32 %v1084, %v1085
        %1176 = vadd.xlane.f32.xlu0 %v1175
        %v1177 = vpop.xlane.xlu0 %1176
        %v1178 = vadd.f32 %v1086, %v1087
        %1179 = vadd.xlane.f32.xlu0 %v1178
        %v1180 = vpop.xlane.xlu0 %1179
        %v1181 = vadd.f32 %v1088, %v1089
        %1182 = vadd.xlane.f32.xlu0 %v1181
        %v1183 = vpop.xlane.xlu0 %1182
        %v1184 = vadd.f32 %v1090, %v1091
        %1185 = vadd.xlane.f32.xlu0 %v1184
        %v1186 = vpop.xlane.xlu0 %1185
        %v1187 = vadd.f32 %v1092, %v1093
        %1188 = vadd.xlane.f32.xlu0 %v1187
        %v1189 = vpop.xlane.xlu0 %1188
        %v1190 = vadd.f32 %v1096, 0.0
        %v1191 = vadd.f32 %v1099, 0.0
        %v1192 = vadd.f32 %v1102, 0.0
        %v1193 = vadd.f32 %v1105, 0.0
        %v1194 = vadd.f32 %v1108, 0.0
        %v1195 = vadd.f32 %v1111, 0.0
        %v1196 = vadd.f32 %v1114, 0.0
        %v1197 = vadd.f32 %v1117, 0.0
        %v1198 = vadd.f32 %v1120, 0.0
        %v1199 = vadd.f32 %v1123, 0.0
        %v1200 = vadd.f32 %v1126, 0.0
        %v1201 = vadd.f32 %v1129, 0.0
        %v1202 = vadd.f32 %v1132, 0.0
        %v1203 = vadd.f32 %v1135, 0.0
        %v1204 = vadd.f32 %v1138, 0.0
        %v1205 = vadd.f32 %v1141, 0.0
        %v1206 = vadd.f32 %v1144, 0.0
        %v1207 = vadd.f32 %v1147, 0.0
        %v1208 = vadd.f32 %v1150, 0.0
        %v1209 = vadd.f32 %v1153, 0.0
        %v1210 = vadd.f32 %v1156, 0.0
        %v1211 = vadd.f32 %v1159, 0.0
        %v1212 = vadd.f32 %v1162, 0.0
        %v1213 = vadd.f32 %v1165, 0.0
        %v1214 = vadd.f32 %v1168, 0.0
        %v1215 = vadd.f32 %v1171, 0.0
        %v1216 = vadd.f32 %v1174, 0.0
        %v1217 = vadd.f32 %v1177, 0.0
        %v1218 = vadd.f32 %v1180, 0.0
        %v1219 = vadd.f32 %v1183, 0.0
        %v1220 = vadd.f32 %v1186, 0.0
        %v1221 = vadd.f32 %v1189, 0.0
        %v1222 = vmul.f32 %v822, %v822
        %v1223 = vmul.f32 %v935, %v935
        %v1224 = vmul.f32 %v825, %v825
        %v1225 = vmul.f32 %v938, %v938
        %v1226 = vmul.f32 %v828, %v828
        %v1227 = vmul.f32 %v941, %v941
        %v1228 = vmul.f32 %v831, %v831
        %v1229 = vmul.f32 %v944, %v944
        %v1230 = vmul.f32 %v834, %v834
        %v1231 = vmul.f32 %v947, %v947
        %v1232 = vmul.f32 %v837, %v837
        %v1233 = vmul.f32 %v950, %v950
        %v1234 = vmul.f32 %v840, %v840
        %v1235 = vmul.f32 %v953, %v953
        %v1236 = vmul.f32 %v843, %v843
        %v1237 = vmul.f32 %v956, %v956
        %v1238 = vmul.f32 %v846, %v846
        %v1239 = vmul.f32 %v959, %v959
        %v1240 = vmul.f32 %v849, %v849
        %v1241 = vmul.f32 %v962, %v962
        %v1242 = vmul.f32 %v852, %v852
        %v1243 = vmul.f32 %v965, %v965
        %v1244 = vmul.f32 %v855, %v855
        %v1245 = vmul.f32 %v968, %v968
        %v1246 = vmul.f32 %v858, %v858
        %v1247 = vmul.f32 %v971, %v971
        %v1248 = vmul.f32 %v861, %v861
        %v1249 = vmul.f32 %v974, %v974
        %v1250 = vmul.f32 %v864, %v864
        %v1251 = vmul.f32 %v977, %v977
        %v1252 = vmul.f32 %v867, %v867
        %v1253 = vmul.f32 %v980, %v980
        %v1254 = vmul.f32 %v870, %v870
        %v1255 = vmul.f32 %v983, %v983
        %v1256 = vmul.f32 %v873, %v873
        %v1257 = vmul.f32 %v986, %v986
        %v1258 = vmul.f32 %v876, %v876
        %v1259 = vmul.f32 %v989, %v989
        %v1260 = vmul.f32 %v879, %v879
        %v1261 = vmul.f32 %v992, %v992
        %v1262 = vmul.f32 %v882, %v882
        %v1263 = vmul.f32 %v995, %v995
        %v1264 = vmul.f32 %v885, %v885
        %v1265 = vmul.f32 %v998, %v998
        %v1266 = vmul.f32 %v888, %v888
        %v1267 = vmul.f32 %v1001, %v1001
        %v1268 = vmul.f32 %v891, %v891
        %v1269 = vmul.f32 %v1004, %v1004
        %v1270 = vmul.f32 %v894, %v894
        %v1271 = vmul.f32 %v1007, %v1007
        %v1272 = vmul.f32 %v897, %v897
        %v1273 = vmul.f32 %v1010, %v1010
        %v1274 = vmul.f32 %v900, %v900
        %v1275 = vmul.f32 %v1013, %v1013
        %v1276 = vmul.f32 %v903, %v903
        %v1277 = vmul.f32 %v1016, %v1016
        %v1278 = vmul.f32 %v906, %v906
        %v1279 = vmul.f32 %v1019, %v1019
        %v1280 = vmul.f32 %v909, %v909
        %v1281 = vmul.f32 %v1022, %v1022
        %v1282 = vmul.f32 %v912, %v912
        %v1283 = vmul.f32 %v1025, %v1025
        %v1284 = vmul.f32 %v915, %v915
        %v1285 = vmul.f32 %v1028, %v1028
        %v1286 = vadd.f32 %v1222, %v1223
        %1287 = vadd.xlane.f32.xlu0 %v1286
        %v1288 = vpop.xlane.xlu0 %1287
        %v1289 = vadd.f32 %v1224, %v1225
        %1290 = vadd.xlane.f32.xlu0 %v1289
        %v1291 = vpop.xlane.xlu0 %1290
        %v1292 = vadd.f32 %v1226, %v1227
        %1293 = vadd.xlane.f32.xlu0 %v1292
        %v1294 = vpop.xlane.xlu0 %1293
        %v1295 = vadd.f32 %v1228, %v1229
        %1296 = vadd.xlane.f32.xlu0 %v1295
        %v1297 = vpop.xlane.xlu0 %1296
        %v1298 = vadd.f32 %v1230, %v1231
        %1299 = vadd.xlane.f32.xlu0 %v1298
        %v1300 = vpop.xlane.xlu0 %1299
        %v1301 = vadd.f32 %v1232, %v1233
        %1302 = vadd.xlane.f32.xlu0 %v1301
        %v1303 = vpop.xlane.xlu0 %1302
        %v1304 = vadd.f32 %v1234, %v1235
        %1305 = vadd.xlane.f32.xlu0 %v1304
        %v1306 = vpop.xlane.xlu0 %1305
        %v1307 = vadd.f32 %v1236, %v1237
        %1308 = vadd.xlane.f32.xlu0 %v1307
        %v1309 = vpop.xlane.xlu0 %1308
        %v1310 = vadd.f32 %v1238, %v1239
        %1311 = vadd.xlane.f32.xlu0 %v1310
        %v1312 = vpop.xlane.xlu0 %1311
        %v1313 = vadd.f32 %v1240, %v1241
        %1314 = vadd.xlane.f32.xlu0 %v1313
        %v1315 = vpop.xlane.xlu0 %1314
        %v1316 = vadd.f32 %v1242, %v1243
        %1317 = vadd.xlane.f32.xlu0 %v1316
        %v1318 = vpop.xlane.xlu0 %1317
        %v1319 = vadd.f32 %v1244, %v1245
        %1320 = vadd.xlane.f32.xlu0 %v1319
        %v1321 = vpop.xlane.xlu0 %1320
        %v1322 = vadd.f32 %v1246, %v1247
        %1323 = vadd.xlane.f32.xlu0 %v1322
        %v1324 = vpop.xlane.xlu0 %1323
        %v1325 = vadd.f32 %v1248, %v1249
        %1326 = vadd.xlane.f32.xlu0 %v1325
        %v1327 = vpop.xlane.xlu0 %1326
        %v1328 = vadd.f32 %v1250, %v1251
        %1329 = vadd.xlane.f32.xlu0 %v1328
        %v1330 = vpop.xlane.xlu0 %1329
        %v1331 = vadd.f32 %v1252, %v1253
        %1332 = vadd.xlane.f32.xlu0 %v1331
        %v1333 = vpop.xlane.xlu0 %1332
        %v1334 = vadd.f32 %v1254, %v1255
        %1335 = vadd.xlane.f32.xlu0 %v1334
        %v1336 = vpop.xlane.xlu0 %1335
        %v1337 = vadd.f32 %v1256, %v1257
        %1338 = vadd.xlane.f32.xlu0 %v1337
        %v1339 = vpop.xlane.xlu0 %1338
        %v1340 = vadd.f32 %v1258, %v1259
        %1341 = vadd.xlane.f32.xlu0 %v1340
        %v1342 = vpop.xlane.xlu0 %1341
        %v1343 = vadd.f32 %v1260, %v1261
        %1344 = vadd.xlane.f32.xlu0 %v1343
        %v1345 = vpop.xlane.xlu0 %1344
        %v1346 = vadd.f32 %v1262, %v1263
        %1347 = vadd.xlane.f32.xlu0 %v1346
        %v1348 = vpop.xlane.xlu0 %1347
        %v1349 = vadd.f32 %v1264, %v1265
        %1350 = vadd.xlane.f32.xlu0 %v1349
        %v1351 = vpop.xlane.xlu0 %1350
        %v1352 = vadd.f32 %v1266, %v1267
        %1353 = vadd.xlane.f32.xlu0 %v1352
        %v1354 = vpop.xlane.xlu0 %1353
        %v1355 = vadd.f32 %v1268, %v1269
        %1356 = vadd.xlane.f32.xlu0 %v1355
        %v1357 = vpop.xlane.xlu0 %1356
        %v1358 = vadd.f32 %v1270, %v1271
        %1359 = vadd.xlane.f32.xlu0 %v1358
        %v1360 = vpop.xlane.xlu0 %1359
        %v1361 = vadd.f32 %v1272, %v1273
        %1362 = vadd.xlane.f32.xlu0 %v1361
        %v1363 = vpop.xlane.xlu0 %1362
        %v1364 = vadd.f32 %v1274, %v1275
        %1365 = vadd.xlane.f32.xlu0 %v1364
        %v1366 = vpop.xlane.xlu0 %1365
        %v1367 = vadd.f32 %v1276, %v1277
        %1368 = vadd.xlane.f32.xlu0 %v1367
        %v1369 = vpop.xlane.xlu0 %1368
        %v1370 = vadd.f32 %v1278, %v1279
        %1371 = vadd.xlane.f32.xlu0 %v1370
        %v1372 = vpop.xlane.xlu0 %1371
        %v1373 = vadd.f32 %v1280, %v1281
        %1374 = vadd.xlane.f32.xlu0 %v1373
        %v1375 = vpop.xlane.xlu0 %1374
        %v1376 = vadd.f32 %v1282, %v1283
        %1377 = vadd.xlane.f32.xlu0 %v1376
        %v1378 = vpop.xlane.xlu0 %1377
        %v1379 = vadd.f32 %v1284, %v1285
        %1380 = vadd.xlane.f32.xlu0 %v1379
        %v1381 = vpop.xlane.xlu0 %1380
        %v1382 = vadd.f32 %v1288, 0.0
        %v1383 = vadd.f32 %v1291, 0.0
        %v1384 = vadd.f32 %v1294, 0.0
        %v1385 = vadd.f32 %v1297, 0.0
        %v1386 = vadd.f32 %v1300, 0.0
        %v1387 = vadd.f32 %v1303, 0.0
        %v1388 = vadd.f32 %v1306, 0.0
        %v1389 = vadd.f32 %v1309, 0.0
        %v1390 = vadd.f32 %v1312, 0.0
        %v1391 = vadd.f32 %v1315, 0.0
        %v1392 = vadd.f32 %v1318, 0.0
        %v1393 = vadd.f32 %v1321, 0.0
        %v1394 = vadd.f32 %v1324, 0.0
        %v1395 = vadd.f32 %v1327, 0.0
        %v1396 = vadd.f32 %v1330, 0.0
        %v1397 = vadd.f32 %v1333, 0.0
        %v1398 = vadd.f32 %v1336, 0.0
        %v1399 = vadd.f32 %v1339, 0.0
        %v1400 = vadd.f32 %v1342, 0.0
        %v1401 = vadd.f32 %v1345, 0.0
        %v1402 = vadd.f32 %v1348, 0.0
        %v1403 = vadd.f32 %v1351, 0.0
        %v1404 = vadd.f32 %v1354, 0.0
        %v1405 = vadd.f32 %v1357, 0.0
        %v1406 = vadd.f32 %v1360, 0.0
        %v1407 = vadd.f32 %v1363, 0.0
        %v1408 = vadd.f32 %v1366, 0.0
        %v1409 = vadd.f32 %v1369, 0.0
        %v1410 = vadd.f32 %v1372, 0.0
        %v1411 = vadd.f32 %v1375, 0.0
        %v1412 = vadd.f32 %v1378, 0.0
        %v1413 = vadd.f32 %v1381, 0.0
        %v1414 = vmul.f32 %v492, %v822
        %v1415 = vmul.f32 %v605, %v935
        %v1416 = vmul.f32 %v495, %v825
        %v1417 = vmul.f32 %v608, %v938
        %v1418 = vmul.f32 %v498, %v828
        %v1419 = vmul.f32 %v611, %v941
        %v1420 = vmul.f32 %v501, %v831
        %v1421 = vmul.f32 %v614, %v944
        %v1422 = vmul.f32 %v504, %v834
        %v1423 = vmul.f32 %v617, %v947
        %v1424 = vmul.f32 %v507, %v837
        %v1425 = vmul.f32 %v620, %v950
        %v1426 = vmul.f32 %v510, %v840
        %v1427 = vmul.f32 %v623, %v953
        %v1428 = vmul.f32 %v513, %v843
        %v1429 = vmul.f32 %v626, %v956
        %v1430 = vmul.f32 %v516, %v846
        %v1431 = vmul.f32 %v629, %v959
        %v1432 = vmul.f32 %v519, %v849
        %v1433 = vmul.f32 %v632, %v962
        %v1434 = vmul.f32 %v522, %v852
        %v1435 = vmul.f32 %v635, %v965
        %v1436 = vmul.f32 %v525, %v855
        %v1437 = vmul.f32 %v638, %v968
        %v1438 = vmul.f32 %v528, %v858
        %v1439 = vmul.f32 %v641, %v971
        %v1440 = vmul.f32 %v531, %v861
        %v1441 = vmul.f32 %v644, %v974
        %v1442 = vmul.f32 %v534, %v864
        %v1443 = vmul.f32 %v647, %v977
        %v1444 = vmul.f32 %v537, %v867
        %v1445 = vmul.f32 %v650, %v980
        %v1446 = vmul.f32 %v540, %v870
        %v1447 = vmul.f32 %v653, %v983
        %v1448 = vmul.f32 %v543, %v873
        %v1449 = vmul.f32 %v656, %v986
        %v1450 = vmul.f32 %v546, %v876
        %v1451 = vmul.f32 %v659, %v989
        %v1452 = vmul.f32 %v549, %v879
        %v1453 = vmul.f32 %v662, %v992
        %v1454 = vmul.f32 %v552, %v882
        %v1455 = vmul.f32 %v665, %v995
        %v1456 = vmul.f32 %v555, %v885
        %v1457 = vmul.f32 %v668, %v998
        %v1458 = vmul.f32 %v558, %v888
        %v1459 = vmul.f32 %v671, %v1001
        %v1460 = vmul.f32 %v561, %v891
        %v1461 = vmul.f32 %v674, %v1004
        %v1462 = vmul.f32 %v564, %v894
        %v1463 = vmul.f32 %v677, %v1007
        %v1464 = vmul.f32 %v567, %v897
        %v1465 = vmul.f32 %v680, %v1010
        %v1466 = vmul.f32 %v570, %v900
        %v1467 = vmul.f32 %v683, %v1013
        %v1468 = vmul.f32 %v573, %v903
        %v1469 = vmul.f32 %v686, %v1016
        %v1470 = vmul.f32 %v576, %v906
        %v1471 = vmul.f32 %v689, %v1019
        %v1472 = vmul.f32 %v579, %v909
        %v1473 = vmul.f32 %v692, %v1022
        %v1474 = vmul.f32 %v582, %v912
        %v1475 = vmul.f32 %v695, %v1025
        %v1476 = vmul.f32 %v585, %v915
        %v1477 = vmul.f32 %v698, %v1028
        %v1478 = vadd.f32 %v1414, %v1415
        %1479 = vadd.xlane.f32.xlu0 %v1478
        %v1480 = vpop.xlane.xlu0 %1479
        %v1481 = vadd.f32 %v1416, %v1417
        %1482 = vadd.xlane.f32.xlu0 %v1481
        %v1483 = vpop.xlane.xlu0 %1482
        %v1484 = vadd.f32 %v1418, %v1419
        %1485 = vadd.xlane.f32.xlu0 %v1484
        %v1486 = vpop.xlane.xlu0 %1485
        %v1487 = vadd.f32 %v1420, %v1421
        %1488 = vadd.xlane.f32.xlu0 %v1487
        %v1489 = vpop.xlane.xlu0 %1488
        %v1490 = vadd.f32 %v1422, %v1423
        %1491 = vadd.xlane.f32.xlu0 %v1490
        %v1492 = vpop.xlane.xlu0 %1491
        %v1493 = vadd.f32 %v1424, %v1425
        %1494 = vadd.xlane.f32.xlu0 %v1493
        %v1495 = vpop.xlane.xlu0 %1494
        %v1496 = vadd.f32 %v1426, %v1427
        %1497 = vadd.xlane.f32.xlu0 %v1496
        %v1498 = vpop.xlane.xlu0 %1497
        %v1499 = vadd.f32 %v1428, %v1429
        %1500 = vadd.xlane.f32.xlu0 %v1499
        %v1501 = vpop.xlane.xlu0 %1500
        %v1502 = vadd.f32 %v1430, %v1431
        %1503 = vadd.xlane.f32.xlu0 %v1502
        %v1504 = vpop.xlane.xlu0 %1503
        %v1505 = vadd.f32 %v1432, %v1433
        %1506 = vadd.xlane.f32.xlu0 %v1505
        %v1507 = vpop.xlane.xlu0 %1506
        %v1508 = vadd.f32 %v1434, %v1435
        %1509 = vadd.xlane.f32.xlu0 %v1508
        %v1510 = vpop.xlane.xlu0 %1509
        %v1511 = vadd.f32 %v1436, %v1437
        %1512 = vadd.xlane.f32.xlu0 %v1511
        %v1513 = vpop.xlane.xlu0 %1512
        %v1514 = vadd.f32 %v1438, %v1439
        %1515 = vadd.xlane.f32.xlu0 %v1514
        %v1516 = vpop.xlane.xlu0 %1515
        %v1517 = vadd.f32 %v1440, %v1441
        %1518 = vadd.xlane.f32.xlu0 %v1517
        %v1519 = vpop.xlane.xlu0 %1518
        %v1520 = vadd.f32 %v1442, %v1443
        %1521 = vadd.xlane.f32.xlu0 %v1520
        %v1522 = vpop.xlane.xlu0 %1521
        %v1523 = vadd.f32 %v1444, %v1445
        %1524 = vadd.xlane.f32.xlu0 %v1523
        %v1525 = vpop.xlane.xlu0 %1524
        %v1526 = vadd.f32 %v1446, %v1447
        %1527 = vadd.xlane.f32.xlu0 %v1526
        %v1528 = vpop.xlane.xlu0 %1527
        %v1529 = vadd.f32 %v1448, %v1449
        %1530 = vadd.xlane.f32.xlu0 %v1529
        %v1531 = vpop.xlane.xlu0 %1530
        %v1532 = vadd.f32 %v1450, %v1451
        %1533 = vadd.xlane.f32.xlu0 %v1532
        %v1534 = vpop.xlane.xlu0 %1533
        %v1535 = vadd.f32 %v1452, %v1453
        %1536 = vadd.xlane.f32.xlu0 %v1535
        %v1537 = vpop.xlane.xlu0 %1536
        %v1538 = vadd.f32 %v1454, %v1455
        %1539 = vadd.xlane.f32.xlu0 %v1538
        %v1540 = vpop.xlane.xlu0 %1539
        %v1541 = vadd.f32 %v1456, %v1457
        %1542 = vadd.xlane.f32.xlu0 %v1541
        %v1543 = vpop.xlane.xlu0 %1542
        %v1544 = vadd.f32 %v1458, %v1459
        %1545 = vadd.xlane.f32.xlu0 %v1544
        %v1546 = vpop.xlane.xlu0 %1545
        %v1547 = vadd.f32 %v1460, %v1461
        %1548 = vadd.xlane.f32.xlu0 %v1547
        %v1549 = vpop.xlane.xlu0 %1548
        %v1550 = vadd.f32 %v1462, %v1463
        %1551 = vadd.xlane.f32.xlu0 %v1550
        %v1552 = vpop.xlane.xlu0 %1551
        %v1553 = vadd.f32 %v1464, %v1465
        %1554 = vadd.xlane.f32.xlu0 %v1553
        %v1555 = vpop.xlane.xlu0 %1554
        %v1556 = vadd.f32 %v1466, %v1467
        %1557 = vadd.xlane.f32.xlu0 %v1556
        %v1558 = vpop.xlane.xlu0 %1557
        %v1559 = vadd.f32 %v1468, %v1469
        %1560 = vadd.xlane.f32.xlu0 %v1559
        %v1561 = vpop.xlane.xlu0 %1560
        %v1562 = vadd.f32 %v1470, %v1471
        %1563 = vadd.xlane.f32.xlu0 %v1562
        %v1564 = vpop.xlane.xlu0 %1563
        %v1565 = vadd.f32 %v1472, %v1473
        %1566 = vadd.xlane.f32.xlu0 %v1565
        %v1567 = vpop.xlane.xlu0 %1566
        %v1568 = vadd.f32 %v1474, %v1475
        %1569 = vadd.xlane.f32.xlu0 %v1568
        %v1570 = vpop.xlane.xlu0 %1569
        %v1571 = vadd.f32 %v1476, %v1477
        %1572 = vadd.xlane.f32.xlu0 %v1571
        %v1573 = vpop.xlane.xlu0 %1572
        %v1574 = vadd.f32 %v1480, 0.0
        %v1575 = vadd.f32 %v1483, 0.0
        %v1576 = vadd.f32 %v1486, 0.0
        %v1577 = vadd.f32 %v1489, 0.0
        %v1578 = vadd.f32 %v1492, 0.0
        %v1579 = vadd.f32 %v1495, 0.0
        %v1580 = vadd.f32 %v1498, 0.0
        %v1581 = vadd.f32 %v1501, 0.0
        %v1582 = vadd.f32 %v1504, 0.0
        %v1583 = vadd.f32 %v1507, 0.0
        %v1584 = vadd.f32 %v1510, 0.0
        %v1585 = vadd.f32 %v1513, 0.0
        %v1586 = vadd.f32 %v1516, 0.0
        %v1587 = vadd.f32 %v1519, 0.0
        %v1588 = vadd.f32 %v1522, 0.0
        %v1589 = vadd.f32 %v1525, 0.0
        %v1590 = vadd.f32 %v1528, 0.0
        %v1591 = vadd.f32 %v1531, 0.0
        %v1592 = vadd.f32 %v1534, 0.0
        %v1593 = vadd.f32 %v1537, 0.0
        %v1594 = vadd.f32 %v1540, 0.0
        %v1595 = vadd.f32 %v1543, 0.0
        %v1596 = vadd.f32 %v1546, 0.0
        %v1597 = vadd.f32 %v1549, 0.0
        %v1598 = vadd.f32 %v1552, 0.0
        %v1599 = vadd.f32 %v1555, 0.0
        %v1600 = vadd.f32 %v1558, 0.0
        %v1601 = vadd.f32 %v1561, 0.0
        %v1602 = vadd.f32 %v1564, 0.0
        %v1603 = vadd.f32 %v1567, 0.0
        %v1604 = vadd.f32 %v1570, 0.0
        %v1605 = vadd.f32 %v1573, 0.0
        %v1606 = vmax.f32 %v1190, 1e-24
        %v1607 = vmax.f32 %v1191, 1e-24
        %v1608 = vmax.f32 %v1192, 1e-24
        %v1609 = vmax.f32 %v1193, 1e-24
        %v1610 = vmax.f32 %v1194, 1e-24
        %v1611 = vmax.f32 %v1195, 1e-24
        %v1612 = vmax.f32 %v1196, 1e-24
        %v1613 = vmax.f32 %v1197, 1e-24
        %v1614 = vmax.f32 %v1198, 1e-24
        %v1615 = vmax.f32 %v1199, 1e-24
        %v1616 = vmax.f32 %v1200, 1e-24
        %v1617 = vmax.f32 %v1201, 1e-24
        %v1618 = vmax.f32 %v1202, 1e-24
        %v1619 = vmax.f32 %v1203, 1e-24
        %v1620 = vmax.f32 %v1204, 1e-24
        %v1621 = vmax.f32 %v1205, 1e-24
        %v1622 = vmax.f32 %v1206, 1e-24
        %v1623 = vmax.f32 %v1207, 1e-24
        %v1624 = vmax.f32 %v1208, 1e-24
        %v1625 = vmax.f32 %v1209, 1e-24
        %v1626 = vmax.f32 %v1210, 1e-24
        %v1627 = vmax.f32 %v1211, 1e-24
        %v1628 = vmax.f32 %v1212, 1e-24
        %v1629 = vmax.f32 %v1213, 1e-24
        %v1630 = vmax.f32 %v1214, 1e-24
        %v1631 = vmax.f32 %v1215, 1e-24
        %v1632 = vmax.f32 %v1216, 1e-24
        %v1633 = vmax.f32 %v1217, 1e-24
        %v1634 = vmax.f32 %v1218, 1e-24
        %v1635 = vmax.f32 %v1219, 1e-24
        %v1636 = vmax.f32 %v1220, 1e-24
        %v1637 = vmax.f32 %v1221, 1e-24
        %v1638 = vrsqrt.pop %v1606
        %v1639 = vmul.f32 %v1638, %v1606
        %v1640 = vmul.f32 %v1639, %v1638
        %v1641 = vmul.f32 0.5, %v1640
        %v1642 = vsub.f32 1.5, %v1641
        %v1643 = vmul.f32 %v1638, %v1642
        %vm1644 = vweird.f32 %v1606
        %vm1645 = vweird.f32 %v1638
        %vm1646 = vmor %vm1644, %vm1645
        %v1647 = vsel %vm1646, %v1638, %v1643
        %v1648 = vrsqrt.pop %v1607
        %v1649 = vmul.f32 %v1648, %v1607
        %v1650 = vmul.f32 %v1649, %v1648
        %v1651 = vmul.f32 0.5, %v1650
        %v1652 = vsub.f32 1.5, %v1651
        %v1653 = vmul.f32 %v1648, %v1652
        %vm1654 = vweird.f32 %v1607
        %vm1655 = vweird.f32 %v1648
        %vm1656 = vmor %vm1654, %vm1655
        %v1657 = vsel %vm1656, %v1648, %v1653
        %v1658 = vrsqrt.pop %v1608
        %v1659 = vmul.f32 %v1658, %v1608
        %v1660 = vmul.f32 %v1659, %v1658
        %v1661 = vmul.f32 0.5, %v1660
        %v1662 = vsub.f32 1.5, %v1661
        %v1663 = vmul.f32 %v1658, %v1662
        %vm1664 = vweird.f32 %v1608
        %vm1665 = vweird.f32 %v1658
        %vm1666 = vmor %vm1664, %vm1665
        %v1667 = vsel %vm1666, %v1658, %v1663
        %v1668 = vrsqrt.pop %v1609
        %v1669 = vmul.f32 %v1668, %v1609
        %v1670 = vmul.f32 %v1669, %v1668
        %v1671 = vmul.f32 0.5, %v1670
        %v1672 = vsub.f32 1.5, %v1671
        %v1673 = vmul.f32 %v1668, %v1672
        %vm1674 = vweird.f32 %v1609
        %vm1675 = vweird.f32 %v1668
        %vm1676 = vmor %vm1674, %vm1675
        %v1677 = vsel %vm1676, %v1668, %v1673
        %v1678 = vrsqrt.pop %v1610
        %v1679 = vmul.f32 %v1678, %v1610
        %v1680 = vmul.f32 %v1679, %v1678
        %v1681 = vmul.f32 0.5, %v1680
        %v1682 = vsub.f32 1.5, %v1681
        %v1683 = vmul.f32 %v1678, %v1682
        %vm1684 = vweird.f32 %v1610
        %vm1685 = vweird.f32 %v1678
        %vm1686 = vmor %vm1684, %vm1685
        %v1687 = vsel %vm1686, %v1678, %v1683
        %v1688 = vrsqrt.pop %v1611
        %v1689 = vmul.f32 %v1688, %v1611
        %v1690 = vmul.f32 %v1689, %v1688
        %v1691 = vmul.f32 0.5, %v1690
        %v1692 = vsub.f32 1.5, %v1691
        %v1693 = vmul.f32 %v1688, %v1692
        %vm1694 = vweird.f32 %v1611
        %vm1695 = vweird.f32 %v1688
        %vm1696 = vmor %vm1694, %vm1695
        %v1697 = vsel %vm1696, %v1688, %v1693
        %v1698 = vrsqrt.pop %v1612
        %v1699 = vmul.f32 %v1698, %v1612
        %v1700 = vmul.f32 %v1699, %v1698
        %v1701 = vmul.f32 0.5, %v1700
        %v1702 = vsub.f32 1.5, %v1701
        %v1703 = vmul.f32 %v1698, %v1702
        %vm1704 = vweird.f32 %v1612
        %vm1705 = vweird.f32 %v1698
        %vm1706 = vmor %vm1704, %vm1705
        %v1707 = vsel %vm1706, %v1698, %v1703
        %v1708 = vrsqrt.pop %v1613
        %v1709 = vmul.f32 %v1708, %v1613
        %v1710 = vmul.f32 %v1709, %v1708
        %v1711 = vmul.f32 0.5, %v1710
        %v1712 = vsub.f32 1.5, %v1711
        %v1713 = vmul.f32 %v1708, %v1712
        %vm1714 = vweird.f32 %v1613
        %vm1715 = vweird.f32 %v1708
        %vm1716 = vmor %vm1714, %vm1715
        %v1717 = vsel %vm1716, %v1708, %v1713
        %v1718 = vrsqrt.pop %v1614
        %v1719 = vmul.f32 %v1718, %v1614
        %v1720 = vmul.f32 %v1719, %v1718
        %v1721 = vmul.f32 0.5, %v1720
        %v1722 = vsub.f32 1.5, %v1721
        %v1723 = vmul.f32 %v1718, %v1722
        %vm1724 = vweird.f32 %v1614
        %vm1725 = vweird.f32 %v1718
        %vm1726 = vmor %vm1724, %vm1725
        %v1727 = vsel %vm1726, %v1718, %v1723
        %v1728 = vrsqrt.pop %v1615
        %v1729 = vmul.f32 %v1728, %v1615
        %v1730 = vmul.f32 %v1729, %v1728
        %v1731 = vmul.f32 0.5, %v1730
        %v1732 = vsub.f32 1.5, %v1731
        %v1733 = vmul.f32 %v1728, %v1732
        %vm1734 = vweird.f32 %v1615
        %vm1735 = vweird.f32 %v1728
        %vm1736 = vmor %vm1734, %vm1735
        %v1737 = vsel %vm1736, %v1728, %v1733
        %v1738 = vrsqrt.pop %v1616
        %v1739 = vmul.f32 %v1738, %v1616
        %v1740 = vmul.f32 %v1739, %v1738
        %v1741 = vmul.f32 0.5, %v1740
        %v1742 = vsub.f32 1.5, %v1741
        %v1743 = vmul.f32 %v1738, %v1742
        %vm1744 = vweird.f32 %v1616
        %vm1745 = vweird.f32 %v1738
        %vm1746 = vmor %vm1744, %vm1745
        %v1747 = vsel %vm1746, %v1738, %v1743
        %v1748 = vrsqrt.pop %v1617
        %v1749 = vmul.f32 %v1748, %v1617
        %v1750 = vmul.f32 %v1749, %v1748
        %v1751 = vmul.f32 0.5, %v1750
        %v1752 = vsub.f32 1.5, %v1751
        %v1753 = vmul.f32 %v1748, %v1752
        %vm1754 = vweird.f32 %v1617
        %vm1755 = vweird.f32 %v1748
        %vm1756 = vmor %vm1754, %vm1755
        %v1757 = vsel %vm1756, %v1748, %v1753
        %v1758 = vrsqrt.pop %v1618
        %v1759 = vmul.f32 %v1758, %v1618
        %v1760 = vmul.f32 %v1759, %v1758
        %v1761 = vmul.f32 0.5, %v1760
        %v1762 = vsub.f32 1.5, %v1761
        %v1763 = vmul.f32 %v1758, %v1762
        %vm1764 = vweird.f32 %v1618
        %vm1765 = vweird.f32 %v1758
        %vm1766 = vmor %vm1764, %vm1765
        %v1767 = vsel %vm1766, %v1758, %v1763
        %v1768 = vrsqrt.pop %v1619
        %v1769 = vmul.f32 %v1768, %v1619
        %v1770 = vmul.f32 %v1769, %v1768
        %v1771 = vmul.f32 0.5, %v1770
        %v1772 = vsub.f32 1.5, %v1771
        %v1773 = vmul.f32 %v1768, %v1772
        %vm1774 = vweird.f32 %v1619
        %vm1775 = vweird.f32 %v1768
        %vm1776 = vmor %vm1774, %vm1775
        %v1777 = vsel %vm1776, %v1768, %v1773
        %v1778 = vrsqrt.pop %v1620
        %v1779 = vmul.f32 %v1778, %v1620
        %v1780 = vmul.f32 %v1779, %v1778
        %v1781 = vmul.f32 0.5, %v1780
        %v1782 = vsub.f32 1.5, %v1781
        %v1783 = vmul.f32 %v1778, %v1782
        %vm1784 = vweird.f32 %v1620
        %vm1785 = vweird.f32 %v1778
        %vm1786 = vmor %vm1784, %vm1785
        %v1787 = vsel %vm1786, %v1778, %v1783
        %v1788 = vrsqrt.pop %v1621
        %v1789 = vmul.f32 %v1788, %v1621
        %v1790 = vmul.f32 %v1789, %v1788
        %v1791 = vmul.f32 0.5, %v1790
        %v1792 = vsub.f32 1.5, %v1791
        %v1793 = vmul.f32 %v1788, %v1792
        %vm1794 = vweird.f32 %v1621
        %vm1795 = vweird.f32 %v1788
        %vm1796 = vmor %vm1794, %vm1795
        %v1797 = vsel %vm1796, %v1788, %v1793
        %v1798 = vrsqrt.pop %v1622
        %v1799 = vmul.f32 %v1798, %v1622
        %v1800 = vmul.f32 %v1799, %v1798
        %v1801 = vmul.f32 0.5, %v1800
        %v1802 = vsub.f32 1.5, %v1801
        %v1803 = vmul.f32 %v1798, %v1802
        %vm1804 = vweird.f32 %v1622
        %vm1805 = vweird.f32 %v1798
        %vm1806 = vmor %vm1804, %vm1805
        %v1807 = vsel %vm1806, %v1798, %v1803
        %v1808 = vrsqrt.pop %v1623
        %v1809 = vmul.f32 %v1808, %v1623
        %v1810 = vmul.f32 %v1809, %v1808
        %v1811 = vmul.f32 0.5, %v1810
        %v1812 = vsub.f32 1.5, %v1811
        %v1813 = vmul.f32 %v1808, %v1812
        %vm1814 = vweird.f32 %v1623
        %vm1815 = vweird.f32 %v1808
        %vm1816 = vmor %vm1814, %vm1815
        %v1817 = vsel %vm1816, %v1808, %v1813
        %v1818 = vrsqrt.pop %v1624
        %v1819 = vmul.f32 %v1818, %v1624
        %v1820 = vmul.f32 %v1819, %v1818
        %v1821 = vmul.f32 0.5, %v1820
        %v1822 = vsub.f32 1.5, %v1821
        %v1823 = vmul.f32 %v1818, %v1822
        %vm1824 = vweird.f32 %v1624
        %vm1825 = vweird.f32 %v1818
        %vm1826 = vmor %vm1824, %vm1825
        %v1827 = vsel %vm1826, %v1818, %v1823
        %v1828 = vrsqrt.pop %v1625
        %v1829 = vmul.f32 %v1828, %v1625
        %v1830 = vmul.f32 %v1829, %v1828
        %v1831 = vmul.f32 0.5, %v1830
        %v1832 = vsub.f32 1.5, %v1831
        %v1833 = vmul.f32 %v1828, %v1832
        %vm1834 = vweird.f32 %v1625
        %vm1835 = vweird.f32 %v1828
        %vm1836 = vmor %vm1834, %vm1835
        %v1837 = vsel %vm1836, %v1828, %v1833
        %v1838 = vrsqrt.pop %v1626
        %v1839 = vmul.f32 %v1838, %v1626
        %v1840 = vmul.f32 %v1839, %v1838
        %v1841 = vmul.f32 0.5, %v1840
        %v1842 = vsub.f32 1.5, %v1841
        %v1843 = vmul.f32 %v1838, %v1842
        %vm1844 = vweird.f32 %v1626
        %vm1845 = vweird.f32 %v1838
        %vm1846 = vmor %vm1844, %vm1845
        %v1847 = vsel %vm1846, %v1838, %v1843
        %v1848 = vrsqrt.pop %v1627
        %v1849 = vmul.f32 %v1848, %v1627
        %v1850 = vmul.f32 %v1849, %v1848
        %v1851 = vmul.f32 0.5, %v1850
        %v1852 = vsub.f32 1.5, %v1851
        %v1853 = vmul.f32 %v1848, %v1852
        %vm1854 = vweird.f32 %v1627
        %vm1855 = vweird.f32 %v1848
        %vm1856 = vmor %vm1854, %vm1855
        %v1857 = vsel %vm1856, %v1848, %v1853
        %v1858 = vrsqrt.pop %v1628
        %v1859 = vmul.f32 %v1858, %v1628
        %v1860 = vmul.f32 %v1859, %v1858
        %v1861 = vmul.f32 0.5, %v1860
        %v1862 = vsub.f32 1.5, %v1861
        %v1863 = vmul.f32 %v1858, %v1862
        %vm1864 = vweird.f32 %v1628
        %vm1865 = vweird.f32 %v1858
        %vm1866 = vmor %vm1864, %vm1865
        %v1867 = vsel %vm1866, %v1858, %v1863
        %v1868 = vrsqrt.pop %v1629
        %v1869 = vmul.f32 %v1868, %v1629
        %v1870 = vmul.f32 %v1869, %v1868
        %v1871 = vmul.f32 0.5, %v1870
        %v1872 = vsub.f32 1.5, %v1871
        %v1873 = vmul.f32 %v1868, %v1872
        %vm1874 = vweird.f32 %v1629
        %vm1875 = vweird.f32 %v1868
        %vm1876 = vmor %vm1874, %vm1875
        %v1877 = vsel %vm1876, %v1868, %v1873
        %v1878 = vrsqrt.pop %v1630
        %v1879 = vmul.f32 %v1878, %v1630
        %v1880 = vmul.f32 %v1879, %v1878
        %v1881 = vmul.f32 0.5, %v1880
        %v1882 = vsub.f32 1.5, %v1881
        %v1883 = vmul.f32 %v1878, %v1882
        %vm1884 = vweird.f32 %v1630
        %vm1885 = vweird.f32 %v1878
        %vm1886 = vmor %vm1884, %vm1885
        %v1887 = vsel %vm1886, %v1878, %v1883
        %v1888 = vrsqrt.pop %v1631
        %v1889 = vmul.f32 %v1888, %v1631
        %v1890 = vmul.f32 %v1889, %v1888
        %v1891 = vmul.f32 0.5, %v1890
        %v1892 = vsub.f32 1.5, %v1891
        %v1893 = vmul.f32 %v1888, %v1892
        %vm1894 = vweird.f32 %v1631
        %vm1895 = vweird.f32 %v1888
        %vm1896 = vmor %vm1894, %vm1895
        %v1897 = vsel %vm1896, %v1888, %v1893
        %v1898 = vrsqrt.pop %v1632
        %v1899 = vmul.f32 %v1898, %v1632
        %v1900 = vmul.f32 %v1899, %v1898
        %v1901 = vmul.f32 0.5, %v1900
        %v1902 = vsub.f32 1.5, %v1901
        %v1903 = vmul.f32 %v1898, %v1902
        %vm1904 = vweird.f32 %v1632
        %vm1905 = vweird.f32 %v1898
        %vm1906 = vmor %vm1904, %vm1905
        %v1907 = vsel %vm1906, %v1898, %v1903
        %v1908 = vrsqrt.pop %v1633
        %v1909 = vmul.f32 %v1908, %v1633
        %v1910 = vmul.f32 %v1909, %v1908
        %v1911 = vmul.f32 0.5, %v1910
        %v1912 = vsub.f32 1.5, %v1911
        %v1913 = vmul.f32 %v1908, %v1912
        %vm1914 = vweird.f32 %v1633
        %vm1915 = vweird.f32 %v1908
        %vm1916 = vmor %vm1914, %vm1915
        %v1917 = vsel %vm1916, %v1908, %v1913
        %v1918 = vrsqrt.pop %v1634
        %v1919 = vmul.f32 %v1918, %v1634
        %v1920 = vmul.f32 %v1919, %v1918
        %v1921 = vmul.f32 0.5, %v1920
        %v1922 = vsub.f32 1.5, %v1921
        %v1923 = vmul.f32 %v1918, %v1922
        %vm1924 = vweird.f32 %v1634
        %vm1925 = vweird.f32 %v1918
        %vm1926 = vmor %vm1924, %vm1925
        %v1927 = vsel %vm1926, %v1918, %v1923
        %v1928 = vrsqrt.pop %v1635
        %v1929 = vmul.f32 %v1928, %v1635
        %v1930 = vmul.f32 %v1929, %v1928
        %v1931 = vmul.f32 0.5, %v1930
        %v1932 = vsub.f32 1.5, %v1931
        %v1933 = vmul.f32 %v1928, %v1932
        %vm1934 = vweird.f32 %v1635
        %vm1935 = vweird.f32 %v1928
        %vm1936 = vmor %vm1934, %vm1935
        %v1937 = vsel %vm1936, %v1928, %v1933
        %v1938 = vrsqrt.pop %v1636
        %v1939 = vmul.f32 %v1938, %v1636
        %v1940 = vmul.f32 %v1939, %v1938
        %v1941 = vmul.f32 0.5, %v1940
        %v1942 = vsub.f32 1.5, %v1941
        %v1943 = vmul.f32 %v1938, %v1942
        %vm1944 = vweird.f32 %v1636
        %vm1945 = vweird.f32 %v1938
        %vm1946 = vmor %vm1944, %vm1945
        %v1947 = vsel %vm1946, %v1938, %v1943
        %v1948 = vrsqrt.pop %v1637
        %v1949 = vmul.f32 %v1948, %v1637
        %v1950 = vmul.f32 %v1949, %v1948
        %v1951 = vmul.f32 0.5, %v1950
        %v1952 = vsub.f32 1.5, %v1951
        %v1953 = vmul.f32 %v1948, %v1952
        %vm1954 = vweird.f32 %v1637
        %vm1955 = vweird.f32 %v1948
        %vm1956 = vmor %vm1954, %vm1955
        %v1957 = vsel %vm1956, %v1948, %v1953
        %v1958 = vmax.f32 %v1382, 1e-24
        %v1959 = vmax.f32 %v1383, 1e-24
        %v1960 = vmax.f32 %v1384, 1e-24
        %v1961 = vmax.f32 %v1385, 1e-24
        %v1962 = vmax.f32 %v1386, 1e-24
        %v1963 = vmax.f32 %v1387, 1e-24
        %v1964 = vmax.f32 %v1388, 1e-24
        %v1965 = vmax.f32 %v1389, 1e-24
        %v1966 = vmax.f32 %v1390, 1e-24
        %v1967 = vmax.f32 %v1391, 1e-24
        %v1968 = vmax.f32 %v1392, 1e-24
        %v1969 = vmax.f32 %v1393, 1e-24
        %v1970 = vmax.f32 %v1394, 1e-24
        %v1971 = vmax.f32 %v1395, 1e-24
        %v1972 = vmax.f32 %v1396, 1e-24
        %v1973 = vmax.f32 %v1397, 1e-24
        %v1974 = vmax.f32 %v1398, 1e-24
        %v1975 = vmax.f32 %v1399, 1e-24
        %v1976 = vmax.f32 %v1400, 1e-24
        %v1977 = vmax.f32 %v1401, 1e-24
        %v1978 = vmax.f32 %v1402, 1e-24
        %v1979 = vmax.f32 %v1403, 1e-24
        %v1980 = vmax.f32 %v1404, 1e-24
        %v1981 = vmax.f32 %v1405, 1e-24
        %v1982 = vmax.f32 %v1406, 1e-24
        %v1983 = vmax.f32 %v1407, 1e-24
        %v1984 = vmax.f32 %v1408, 1e-24
        %v1985 = vmax.f32 %v1409, 1e-24
        %v1986 = vmax.f32 %v1410, 1e-24
        %v1987 = vmax.f32 %v1411, 1e-24
        %v1988 = vmax.f32 %v1412, 1e-24
        %v1989 = vmax.f32 %v1413, 1e-24
        %v1990 = vrsqrt.pop %v1958
        %v1991 = vmul.f32 %v1990, %v1958
        %v1992 = vmul.f32 %v1991, %v1990
        %v1993 = vmul.f32 0.5, %v1992
        %v1994 = vsub.f32 1.5, %v1993
        %v1995 = vmul.f32 %v1990, %v1994
        %vm1996 = vweird.f32 %v1958
        %vm1997 = vweird.f32 %v1990
        %vm1998 = vmor %vm1996, %vm1997
        %v1999 = vsel %vm1998, %v1990, %v1995
        %v2000 = vrsqrt.pop %v1959
        %v2001 = vmul.f32 %v2000, %v1959
        %v2002 = vmul.f32 %v2001, %v2000
        %v2003 = vmul.f32 0.5, %v2002
        %v2004 = vsub.f32 1.5, %v2003
        %v2005 = vmul.f32 %v2000, %v2004
        %vm2006 = vweird.f32 %v1959
        %vm2007 = vweird.f32 %v2000
        %vm2008 = vmor %vm2006, %vm2007
        %v2009 = vsel %vm2008, %v2000, %v2005
        %v2010 = vrsqrt.pop %v1960
        %v2011 = vmul.f32 %v2010, %v1960
        %v2012 = vmul.f32 %v2011, %v2010
        %v2013 = vmul.f32 0.5, %v2012
        %v2014 = vsub.f32 1.5, %v2013
        %v2015 = vmul.f32 %v2010, %v2014
        %vm2016 = vweird.f32 %v1960
        %vm2017 = vweird.f32 %v2010
        %vm2018 = vmor %vm2016, %vm2017
        %v2019 = vsel %vm2018, %v2010, %v2015
        %v2020 = vrsqrt.pop %v1961
        %v2021 = vmul.f32 %v2020, %v1961
        %v2022 = vmul.f32 %v2021, %v2020
        %v2023 = vmul.f32 0.5, %v2022
        %v2024 = vsub.f32 1.5, %v2023
        %v2025 = vmul.f32 %v2020, %v2024
        %vm2026 = vweird.f32 %v1961
        %vm2027 = vweird.f32 %v2020
        %vm2028 = vmor %vm2026, %vm2027
        %v2029 = vsel %vm2028, %v2020, %v2025
        %v2030 = vrsqrt.pop %v1962
        %v2031 = vmul.f32 %v2030, %v1962
        %v2032 = vmul.f32 %v2031, %v2030
        %v2033 = vmul.f32 0.5, %v2032
        %v2034 = vsub.f32 1.5, %v2033
        %v2035 = vmul.f32 %v2030, %v2034
        %vm2036 = vweird.f32 %v1962
        %vm2037 = vweird.f32 %v2030
        %vm2038 = vmor %vm2036, %vm2037
        %v2039 = vsel %vm2038, %v2030, %v2035
        %v2040 = vrsqrt.pop %v1963
        %v2041 = vmul.f32 %v2040, %v1963
        %v2042 = vmul.f32 %v2041, %v2040
        %v2043 = vmul.f32 0.5, %v2042
        %v2044 = vsub.f32 1.5, %v2043
        %v2045 = vmul.f32 %v2040, %v2044
        %vm2046 = vweird.f32 %v1963
        %vm2047 = vweird.f32 %v2040
        %vm2048 = vmor %vm2046, %vm2047
        %v2049 = vsel %vm2048, %v2040, %v2045
        %v2050 = vrsqrt.pop %v1964
        %v2051 = vmul.f32 %v2050, %v1964
        %v2052 = vmul.f32 %v2051, %v2050
        %v2053 = vmul.f32 0.5, %v2052
        %v2054 = vsub.f32 1.5, %v2053
        %v2055 = vmul.f32 %v2050, %v2054
        %vm2056 = vweird.f32 %v1964
        %vm2057 = vweird.f32 %v2050
        %vm2058 = vmor %vm2056, %vm2057
        %v2059 = vsel %vm2058, %v2050, %v2055
        %v2060 = vrsqrt.pop %v1965
        %v2061 = vmul.f32 %v2060, %v1965
        %v2062 = vmul.f32 %v2061, %v2060
        %v2063 = vmul.f32 0.5, %v2062
        %v2064 = vsub.f32 1.5, %v2063
        %v2065 = vmul.f32 %v2060, %v2064
        %vm2066 = vweird.f32 %v1965
        %vm2067 = vweird.f32 %v2060
        %vm2068 = vmor %vm2066, %vm2067
        %v2069 = vsel %vm2068, %v2060, %v2065
        %v2070 = vrsqrt.pop %v1966
        %v2071 = vmul.f32 %v2070, %v1966
        %v2072 = vmul.f32 %v2071, %v2070
        %v2073 = vmul.f32 0.5, %v2072
        %v2074 = vsub.f32 1.5, %v2073
        %v2075 = vmul.f32 %v2070, %v2074
        %vm2076 = vweird.f32 %v1966
        %vm2077 = vweird.f32 %v2070
        %vm2078 = vmor %vm2076, %vm2077
        %v2079 = vsel %vm2078, %v2070, %v2075
        %v2080 = vrsqrt.pop %v1967
        %v2081 = vmul.f32 %v2080, %v1967
        %v2082 = vmul.f32 %v2081, %v2080
        %v2083 = vmul.f32 0.5, %v2082
        %v2084 = vsub.f32 1.5, %v2083
        %v2085 = vmul.f32 %v2080, %v2084
        %vm2086 = vweird.f32 %v1967
        %vm2087 = vweird.f32 %v2080
        %vm2088 = vmor %vm2086, %vm2087
        %v2089 = vsel %vm2088, %v2080, %v2085
        %v2090 = vrsqrt.pop %v1968
        %v2091 = vmul.f32 %v2090, %v1968
        %v2092 = vmul.f32 %v2091, %v2090
        %v2093 = vmul.f32 0.5, %v2092
        %v2094 = vsub.f32 1.5, %v2093
        %v2095 = vmul.f32 %v2090, %v2094
        %vm2096 = vweird.f32 %v1968
        %vm2097 = vweird.f32 %v2090
        %vm2098 = vmor %vm2096, %vm2097
        %v2099 = vsel %vm2098, %v2090, %v2095
        %v2100 = vrsqrt.pop %v1969
        %v2101 = vmul.f32 %v2100, %v1969
        %v2102 = vmul.f32 %v2101, %v2100
        %v2103 = vmul.f32 0.5, %v2102
        %v2104 = vsub.f32 1.5, %v2103
        %v2105 = vmul.f32 %v2100, %v2104
        %vm2106 = vweird.f32 %v1969
        %vm2107 = vweird.f32 %v2100
        %vm2108 = vmor %vm2106, %vm2107
        %v2109 = vsel %vm2108, %v2100, %v2105
        %v2110 = vrsqrt.pop %v1970
        %v2111 = vmul.f32 %v2110, %v1970
        %v2112 = vmul.f32 %v2111, %v2110
        %v2113 = vmul.f32 0.5, %v2112
        %v2114 = vsub.f32 1.5, %v2113
        %v2115 = vmul.f32 %v2110, %v2114
        %vm2116 = vweird.f32 %v1970
        %vm2117 = vweird.f32 %v2110
        %vm2118 = vmor %vm2116, %vm2117
        %v2119 = vsel %vm2118, %v2110, %v2115
        %v2120 = vrsqrt.pop %v1971
        %v2121 = vmul.f32 %v2120, %v1971
        %v2122 = vmul.f32 %v2121, %v2120
        %v2123 = vmul.f32 0.5, %v2122
        %v2124 = vsub.f32 1.5, %v2123
        %v2125 = vmul.f32 %v2120, %v2124
        %vm2126 = vweird.f32 %v1971
        %vm2127 = vweird.f32 %v2120
        %vm2128 = vmor %vm2126, %vm2127
        %v2129 = vsel %vm2128, %v2120, %v2125
        %v2130 = vrsqrt.pop %v1972
        %v2131 = vmul.f32 %v2130, %v1972
        %v2132 = vmul.f32 %v2131, %v2130
        %v2133 = vmul.f32 0.5, %v2132
        %v2134 = vsub.f32 1.5, %v2133
        %v2135 = vmul.f32 %v2130, %v2134
        %vm2136 = vweird.f32 %v1972
        %vm2137 = vweird.f32 %v2130
        %vm2138 = vmor %vm2136, %vm2137
        %v2139 = vsel %vm2138, %v2130, %v2135
        %v2140 = vrsqrt.pop %v1973
        %v2141 = vmul.f32 %v2140, %v1973
        %v2142 = vmul.f32 %v2141, %v2140
        %v2143 = vmul.f32 0.5, %v2142
        %v2144 = vsub.f32 1.5, %v2143
        %v2145 = vmul.f32 %v2140, %v2144
        %vm2146 = vweird.f32 %v1973
        %vm2147 = vweird.f32 %v2140
        %vm2148 = vmor %vm2146, %vm2147
        %v2149 = vsel %vm2148, %v2140, %v2145
        %v2150 = vrsqrt.pop %v1974
        %v2151 = vmul.f32 %v2150, %v1974
        %v2152 = vmul.f32 %v2151, %v2150
        %v2153 = vmul.f32 0.5, %v2152
        %v2154 = vsub.f32 1.5, %v2153
        %v2155 = vmul.f32 %v2150, %v2154
        %vm2156 = vweird.f32 %v1974
        %vm2157 = vweird.f32 %v2150
        %vm2158 = vmor %vm2156, %vm2157
        %v2159 = vsel %vm2158, %v2150, %v2155
        %v2160 = vrsqrt.pop %v1975
        %v2161 = vmul.f32 %v2160, %v1975
        %v2162 = vmul.f32 %v2161, %v2160
        %v2163 = vmul.f32 0.5, %v2162
        %v2164 = vsub.f32 1.5, %v2163
        %v2165 = vmul.f32 %v2160, %v2164
        %vm2166 = vweird.f32 %v1975
        %vm2167 = vweird.f32 %v2160
        %vm2168 = vmor %vm2166, %vm2167
        %v2169 = vsel %vm2168, %v2160, %v2165
        %v2170 = vrsqrt.pop %v1976
        %v2171 = vmul.f32 %v2170, %v1976
        %v2172 = vmul.f32 %v2171, %v2170
        %v2173 = vmul.f32 0.5, %v2172
        %v2174 = vsub.f32 1.5, %v2173
        %v2175 = vmul.f32 %v2170, %v2174
        %vm2176 = vweird.f32 %v1976
        %vm2177 = vweird.f32 %v2170
        %vm2178 = vmor %vm2176, %vm2177
        %v2179 = vsel %vm2178, %v2170, %v2175
        %v2180 = vrsqrt.pop %v1977
        %v2181 = vmul.f32 %v2180, %v1977
        %v2182 = vmul.f32 %v2181, %v2180
        %v2183 = vmul.f32 0.5, %v2182
        %v2184 = vsub.f32 1.5, %v2183
        %v2185 = vmul.f32 %v2180, %v2184
        %vm2186 = vweird.f32 %v1977
        %vm2187 = vweird.f32 %v2180
        %vm2188 = vmor %vm2186, %vm2187
        %v2189 = vsel %vm2188, %v2180, %v2185
        %v2190 = vrsqrt.pop %v1978
        %v2191 = vmul.f32 %v2190, %v1978
        %v2192 = vmul.f32 %v2191, %v2190
        %v2193 = vmul.f32 0.5, %v2192
        %v2194 = vsub.f32 1.5, %v2193
        %v2195 = vmul.f32 %v2190, %v2194
        %vm2196 = vweird.f32 %v1978
        %vm2197 = vweird.f32 %v2190
        %vm2198 = vmor %vm2196, %vm2197
        %v2199 = vsel %vm2198, %v2190, %v2195
        %v2200 = vrsqrt.pop %v1979
        %v2201 = vmul.f32 %v2200, %v1979
        %v2202 = vmul.f32 %v2201, %v2200
        %v2203 = vmul.f32 0.5, %v2202
        %v2204 = vsub.f32 1.5, %v2203
        %v2205 = vmul.f32 %v2200, %v2204
        %vm2206 = vweird.f32 %v1979
        %vm2207 = vweird.f32 %v2200
        %vm2208 = vmor %vm2206, %vm2207
        %v2209 = vsel %vm2208, %v2200, %v2205
        %v2210 = vrsqrt.pop %v1980
        %v2211 = vmul.f32 %v2210, %v1980
        %v2212 = vmul.f32 %v2211, %v2210
        %v2213 = vmul.f32 0.5, %v2212
        %v2214 = vsub.f32 1.5, %v2213
        %v2215 = vmul.f32 %v2210, %v2214
        %vm2216 = vweird.f32 %v1980
        %vm2217 = vweird.f32 %v2210
        %vm2218 = vmor %vm2216, %vm2217
        %v2219 = vsel %vm2218, %v2210, %v2215
        %v2220 = vrsqrt.pop %v1981
        %v2221 = vmul.f32 %v2220, %v1981
        %v2222 = vmul.f32 %v2221, %v2220
        %v2223 = vmul.f32 0.5, %v2222
        %v2224 = vsub.f32 1.5, %v2223
        %v2225 = vmul.f32 %v2220, %v2224
        %vm2226 = vweird.f32 %v1981
        %vm2227 = vweird.f32 %v2220
        %vm2228 = vmor %vm2226, %vm2227
        %v2229 = vsel %vm2228, %v2220, %v2225
        %v2230 = vrsqrt.pop %v1982
        %v2231 = vmul.f32 %v2230, %v1982
        %v2232 = vmul.f32 %v2231, %v2230
        %v2233 = vmul.f32 0.5, %v2232
        %v2234 = vsub.f32 1.5, %v2233
        %v2235 = vmul.f32 %v2230, %v2234
        %vm2236 = vweird.f32 %v1982
        %vm2237 = vweird.f32 %v2230
        %vm2238 = vmor %vm2236, %vm2237
        %v2239 = vsel %vm2238, %v2230, %v2235
        %v2240 = vrsqrt.pop %v1983
        %v2241 = vmul.f32 %v2240, %v1983
        %v2242 = vmul.f32 %v2241, %v2240
        %v2243 = vmul.f32 0.5, %v2242
        %v2244 = vsub.f32 1.5, %v2243
        %v2245 = vmul.f32 %v2240, %v2244
        %vm2246 = vweird.f32 %v1983
        %vm2247 = vweird.f32 %v2240
        %vm2248 = vmor %vm2246, %vm2247
        %v2249 = vsel %vm2248, %v2240, %v2245
        %v2250 = vrsqrt.pop %v1984
        %v2251 = vmul.f32 %v2250, %v1984
        %v2252 = vmul.f32 %v2251, %v2250
        %v2253 = vmul.f32 0.5, %v2252
        %v2254 = vsub.f32 1.5, %v2253
        %v2255 = vmul.f32 %v2250, %v2254
        %vm2256 = vweird.f32 %v1984
        %vm2257 = vweird.f32 %v2250
        %vm2258 = vmor %vm2256, %vm2257
        %v2259 = vsel %vm2258, %v2250, %v2255
        %v2260 = vrsqrt.pop %v1985
        %v2261 = vmul.f32 %v2260, %v1985
        %v2262 = vmul.f32 %v2261, %v2260
        %v2263 = vmul.f32 0.5, %v2262
        %v2264 = vsub.f32 1.5, %v2263
        %v2265 = vmul.f32 %v2260, %v2264
        %vm2266 = vweird.f32 %v1985
        %vm2267 = vweird.f32 %v2260
        %vm2268 = vmor %vm2266, %vm2267
        %v2269 = vsel %vm2268, %v2260, %v2265
        %v2270 = vrsqrt.pop %v1986
        %v2271 = vmul.f32 %v2270, %v1986
        %v2272 = vmul.f32 %v2271, %v2270
        %v2273 = vmul.f32 0.5, %v2272
        %v2274 = vsub.f32 1.5, %v2273
        %v2275 = vmul.f32 %v2270, %v2274
        %vm2276 = vweird.f32 %v1986
        %vm2277 = vweird.f32 %v2270
        %vm2278 = vmor %vm2276, %vm2277
        %v2279 = vsel %vm2278, %v2270, %v2275
        %v2280 = vrsqrt.pop %v1987
        %v2281 = vmul.f32 %v2280, %v1987
        %v2282 = vmul.f32 %v2281, %v2280
        %v2283 = vmul.f32 0.5, %v2282
        %v2284 = vsub.f32 1.5, %v2283
        %v2285 = vmul.f32 %v2280, %v2284
        %vm2286 = vweird.f32 %v1987
        %vm2287 = vweird.f32 %v2280
        %vm2288 = vmor %vm2286, %vm2287
        %v2289 = vsel %vm2288, %v2280, %v2285
        %v2290 = vrsqrt.pop %v1988
        %v2291 = vmul.f32 %v2290, %v1988
        %v2292 = vmul.f32 %v2291, %v2290
        %v2293 = vmul.f32 0.5, %v2292
        %v2294 = vsub.f32 1.5, %v2293
        %v2295 = vmul.f32 %v2290, %v2294
        %vm2296 = vweird.f32 %v1988
        %vm2297 = vweird.f32 %v2290
        %vm2298 = vmor %vm2296, %vm2297
        %v2299 = vsel %vm2298, %v2290, %v2295
        %v2300 = vrsqrt.pop %v1989
        %v2301 = vmul.f32 %v2300, %v1989
        %v2302 = vmul.f32 %v2301, %v2300
        %v2303 = vmul.f32 0.5, %v2302
        %v2304 = vsub.f32 1.5, %v2303
        %v2305 = vmul.f32 %v2300, %v2304
        %vm2306 = vweird.f32 %v1989
        %vm2307 = vweird.f32 %v2300
        %vm2308 = vmor %vm2306, %vm2307
        %v2309 = vsel %vm2308, %v2300, %v2305
        %v2310 = vmul.f32 %v1647, %v1647
        %v2311 = vmul.f32 %v1657, %v1657
        %v2312 = vmul.f32 %v1667, %v1667
        %v2313 = vmul.f32 %v1677, %v1677
        %v2314 = vmul.f32 %v1687, %v1687
        %v2315 = vmul.f32 %v1697, %v1697
        %v2316 = vmul.f32 %v1707, %v1707
        %v2317 = vmul.f32 %v1717, %v1717
        %v2318 = vmul.f32 %v1727, %v1727
        %v2319 = vmul.f32 %v1737, %v1737
        %v2320 = vmul.f32 %v1747, %v1747
        %v2321 = vmul.f32 %v1757, %v1757
        %v2322 = vmul.f32 %v1767, %v1767
        %v2323 = vmul.f32 %v1777, %v1777
        %v2324 = vmul.f32 %v1787, %v1787
        %v2325 = vmul.f32 %v1797, %v1797
        %v2326 = vmul.f32 %v1807, %v1807
        %v2327 = vmul.f32 %v1817, %v1817
        %v2328 = vmul.f32 %v1827, %v1827
        %v2329 = vmul.f32 %v1837, %v1837
        %v2330 = vmul.f32 %v1847, %v1847
        %v2331 = vmul.f32 %v1857, %v1857
        %v2332 = vmul.f32 %v1867, %v1867
        %v2333 = vmul.f32 %v1877, %v1877
        %v2334 = vmul.f32 %v1887, %v1887
        %v2335 = vmul.f32 %v1897, %v1897
        %v2336 = vmul.f32 %v1907, %v1907
        %v2337 = vmul.f32 %v1917, %v1917
        %v2338 = vmul.f32 %v1927, %v1927
        %v2339 = vmul.f32 %v1937, %v1937
        %v2340 = vmul.f32 %v1947, %v1947
        %v2341 = vmul.f32 %v1957, %v1957
        %v2342 = vmul.f32 %v1190, %v2310
        %v2343 = vmul.f32 %v1191, %v2311
        %v2344 = vmul.f32 %v1192, %v2312
        %v2345 = vmul.f32 %v1193, %v2313
        %v2346 = vmul.f32 %v1194, %v2314
        %v2347 = vmul.f32 %v1195, %v2315
        %v2348 = vmul.f32 %v1196, %v2316
        %v2349 = vmul.f32 %v1197, %v2317
        %v2350 = vmul.f32 %v1198, %v2318
        %v2351 = vmul.f32 %v1199, %v2319
        %v2352 = vmul.f32 %v1200, %v2320
        %v2353 = vmul.f32 %v1201, %v2321
        %v2354 = vmul.f32 %v1202, %v2322
        %v2355 = vmul.f32 %v1203, %v2323
        %v2356 = vmul.f32 %v1204, %v2324
        %v2357 = vmul.f32 %v1205, %v2325
        %v2358 = vmul.f32 %v1206, %v2326
        %v2359 = vmul.f32 %v1207, %v2327
        %v2360 = vmul.f32 %v1208, %v2328
        %v2361 = vmul.f32 %v1209, %v2329
        %v2362 = vmul.f32 %v1210, %v2330
        %v2363 = vmul.f32 %v1211, %v2331
        %v2364 = vmul.f32 %v1212, %v2332
        %v2365 = vmul.f32 %v1213, %v2333
        %v2366 = vmul.f32 %v1214, %v2334
        %v2367 = vmul.f32 %v1215, %v2335
        %v2368 = vmul.f32 %v1216, %v2336
        %v2369 = vmul.f32 %v1217, %v2337
        %v2370 = vmul.f32 %v1218, %v2338
        %v2371 = vmul.f32 %v1219, %v2339
        %v2372 = vmul.f32 %v1220, %v2340
        %v2373 = vmul.f32 %v1221, %v2341
        %v2374 = vmul.f32 %v1999, %v1999
        %v2375 = vmul.f32 %v2009, %v2009
        %v2376 = vmul.f32 %v2019, %v2019
        %v2377 = vmul.f32 %v2029, %v2029
        %v2378 = vmul.f32 %v2039, %v2039
        %v2379 = vmul.f32 %v2049, %v2049
        %v2380 = vmul.f32 %v2059, %v2059
        %v2381 = vmul.f32 %v2069, %v2069
        %v2382 = vmul.f32 %v2079, %v2079
        %v2383 = vmul.f32 %v2089, %v2089
        %v2384 = vmul.f32 %v2099, %v2099
        %v2385 = vmul.f32 %v2109, %v2109
        %v2386 = vmul.f32 %v2119, %v2119
        %v2387 = vmul.f32 %v2129, %v2129
        %v2388 = vmul.f32 %v2139, %v2139
        %v2389 = vmul.f32 %v2149, %v2149
        %v2390 = vmul.f32 %v2159, %v2159
        %v2391 = vmul.f32 %v2169, %v2169
        %v2392 = vmul.f32 %v2179, %v2179
        %v2393 = vmul.f32 %v2189, %v2189
        %v2394 = vmul.f32 %v2199, %v2199
        %v2395 = vmul.f32 %v2209, %v2209
        %v2396 = vmul.f32 %v2219, %v2219
        %v2397 = vmul.f32 %v2229, %v2229
        %v2398 = vmul.f32 %v2239, %v2239
        %v2399 = vmul.f32 %v2249, %v2249
        %v2400 = vmul.f32 %v2259, %v2259
        %v2401 = vmul.f32 %v2269, %v2269
        %v2402 = vmul.f32 %v2279, %v2279
        %v2403 = vmul.f32 %v2289, %v2289
        %v2404 = vmul.f32 %v2299, %v2299
        %v2405 = vmul.f32 %v2309, %v2309
        %v2406 = vmul.f32 %v1382, %v2374
        %v2407 = vmul.f32 %v1383, %v2375
        %v2408 = vmul.f32 %v1384, %v2376
        %v2409 = vmul.f32 %v1385, %v2377
        %v2410 = vmul.f32 %v1386, %v2378
        %v2411 = vmul.f32 %v1387, %v2379
        %v2412 = vmul.f32 %v1388, %v2380
        %v2413 = vmul.f32 %v1389, %v2381
        %v2414 = vmul.f32 %v1390, %v2382
        %v2415 = vmul.f32 %v1391, %v2383
        %v2416 = vmul.f32 %v1392, %v2384
        %v2417 = vmul.f32 %v1393, %v2385
        %v2418 = vmul.f32 %v1394, %v2386
        %v2419 = vmul.f32 %v1395, %v2387
        %v2420 = vmul.f32 %v1396, %v2388
        %v2421 = vmul.f32 %v1397, %v2389
        %v2422 = vmul.f32 %v1398, %v2390
        %v2423 = vmul.f32 %v1399, %v2391
        %v2424 = vmul.f32 %v1400, %v2392
        %v2425 = vmul.f32 %v1401, %v2393
        %v2426 = vmul.f32 %v1402, %v2394
        %v2427 = vmul.f32 %v1403, %v2395
        %v2428 = vmul.f32 %v1404, %v2396
        %v2429 = vmul.f32 %v1405, %v2397
        %v2430 = vmul.f32 %v1406, %v2398
        %v2431 = vmul.f32 %v1407, %v2399
        %v2432 = vmul.f32 %v1408, %v2400
        %v2433 = vmul.f32 %v1409, %v2401
        %v2434 = vmul.f32 %v1410, %v2402
        %v2435 = vmul.f32 %v1411, %v2403
        %v2436 = vmul.f32 %v1412, %v2404
        %v2437 = vmul.f32 %v1413, %v2405
        %v2438 = vadd.f32 %v2342, %v2406
        %v2439 = vadd.f32 %v2343, %v2407
        %v2440 = vadd.f32 %v2344, %v2408
        %v2441 = vadd.f32 %v2345, %v2409
        %v2442 = vadd.f32 %v2346, %v2410
        %v2443 = vadd.f32 %v2347, %v2411
        %v2444 = vadd.f32 %v2348, %v2412
        %v2445 = vadd.f32 %v2349, %v2413
        %v2446 = vadd.f32 %v2350, %v2414
        %v2447 = vadd.f32 %v2351, %v2415
        %v2448 = vadd.f32 %v2352, %v2416
        %v2449 = vadd.f32 %v2353, %v2417
        %v2450 = vadd.f32 %v2354, %v2418
        %v2451 = vadd.f32 %v2355, %v2419
        %v2452 = vadd.f32 %v2356, %v2420
        %v2453 = vadd.f32 %v2357, %v2421
        %v2454 = vadd.f32 %v2358, %v2422
        %v2455 = vadd.f32 %v2359, %v2423
        %v2456 = vadd.f32 %v2360, %v2424
        %v2457 = vadd.f32 %v2361, %v2425
        %v2458 = vadd.f32 %v2362, %v2426
        %v2459 = vadd.f32 %v2363, %v2427
        %v2460 = vadd.f32 %v2364, %v2428
        %v2461 = vadd.f32 %v2365, %v2429
        %v2462 = vadd.f32 %v2366, %v2430
        %v2463 = vadd.f32 %v2367, %v2431
        %v2464 = vadd.f32 %v2368, %v2432
        %v2465 = vadd.f32 %v2369, %v2433
        %v2466 = vadd.f32 %v2370, %v2434
        %v2467 = vadd.f32 %v2371, %v2435
        %v2468 = vadd.f32 %v2372, %v2436
        %v2469 = vadd.f32 %v2373, %v2437
        %v2470 = vmul.f32 %v1574, 2.0
        %v2471 = vmul.f32 %v1575, 2.0
        %v2472 = vmul.f32 %v1576, 2.0
        %v2473 = vmul.f32 %v1577, 2.0
        %v2474 = vmul.f32 %v1578, 2.0
        %v2475 = vmul.f32 %v1579, 2.0
        %v2476 = vmul.f32 %v1580, 2.0
        %v2477 = vmul.f32 %v1581, 2.0
        %v2478 = vmul.f32 %v1582, 2.0
        %v2479 = vmul.f32 %v1583, 2.0
        %v2480 = vmul.f32 %v1584, 2.0
        %v2481 = vmul.f32 %v1585, 2.0
        %v2482 = vmul.f32 %v1586, 2.0
        %v2483 = vmul.f32 %v1587, 2.0
        %v2484 = vmul.f32 %v1588, 2.0
        %v2485 = vmul.f32 %v1589, 2.0
        %v2486 = vmul.f32 %v1590, 2.0
        %v2487 = vmul.f32 %v1591, 2.0
        %v2488 = vmul.f32 %v1592, 2.0
        %v2489 = vmul.f32 %v1593, 2.0
        %v2490 = vmul.f32 %v1594, 2.0
        %v2491 = vmul.f32 %v1595, 2.0
        %v2492 = vmul.f32 %v1596, 2.0
        %v2493 = vmul.f32 %v1597, 2.0
        %v2494 = vmul.f32 %v1598, 2.0
        %v2495 = vmul.f32 %v1599, 2.0
        %v2496 = vmul.f32 %v1600, 2.0
        %v2497 = vmul.f32 %v1601, 2.0
        %v2498 = vmul.f32 %v1602, 2.0
        %v2499 = vmul.f32 %v1603, 2.0
        %v2500 = vmul.f32 %v1604, 2.0
        %v2501 = vmul.f32 %v1605, 2.0
        %v2502 = vmul.f32 %v1647, %v1999
        %v2503 = vmul.f32 %v1657, %v2009
        %v2504 = vmul.f32 %v1667, %v2019
        %v2505 = vmul.f32 %v1677, %v2029
        %v2506 = vmul.f32 %v1687, %v2039
        %v2507 = vmul.f32 %v1697, %v2049
        %v2508 = vmul.f32 %v1707, %v2059
        %v2509 = vmul.f32 %v1717, %v2069
        %v2510 = vmul.f32 %v1727, %v2079
        %v2511 = vmul.f32 %v1737, %v2089
        %v2512 = vmul.f32 %v1747, %v2099
        %v2513 = vmul.f32 %v1757, %v2109
        %v2514 = vmul.f32 %v1767, %v2119
        %v2515 = vmul.f32 %v1777, %v2129
        %v2516 = vmul.f32 %v1787, %v2139
        %v2517 = vmul.f32 %v1797, %v2149
        %v2518 = vmul.f32 %v1807, %v2159
        %v2519 = vmul.f32 %v1817, %v2169
        %v2520 = vmul.f32 %v1827, %v2179
        %v2521 = vmul.f32 %v1837, %v2189
        %v2522 = vmul.f32 %v1847, %v2199
        %v2523 = vmul.f32 %v1857, %v2209
        %v2524 = vmul.f32 %v1867, %v2219
        %v2525 = vmul.f32 %v1877, %v2229
        %v2526 = vmul.f32 %v1887, %v2239
        %v2527 = vmul.f32 %v1897, %v2249
        %v2528 = vmul.f32 %v1907, %v2259
        %v2529 = vmul.f32 %v1917, %v2269
        %v2530 = vmul.f32 %v1927, %v2279
        %v2531 = vmul.f32 %v1937, %v2289
        %v2532 = vmul.f32 %v1947, %v2299
        %v2533 = vmul.f32 %v1957, %v2309
        %v2534 = vmul.f32 %v2470, %v2502
        %v2535 = vmul.f32 %v2471, %v2503
        %v2536 = vmul.f32 %v2472, %v2504
        %v2537 = vmul.f32 %v2473, %v2505
        %v2538 = vmul.f32 %v2474, %v2506
        %v2539 = vmul.f32 %v2475, %v2507
        %v2540 = vmul.f32 %v2476, %v2508
        %v2541 = vmul.f32 %v2477, %v2509
        %v2542 = vmul.f32 %v2478, %v2510
        %v2543 = vmul.f32 %v2479, %v2511
        %v2544 = vmul.f32 %v2480, %v2512
        %v2545 = vmul.f32 %v2481, %v2513
        %v2546 = vmul.f32 %v2482, %v2514
        %v2547 = vmul.f32 %v2483, %v2515
        %v2548 = vmul.f32 %v2484, %v2516
        %v2549 = vmul.f32 %v2485, %v2517
        %v2550 = vmul.f32 %v2486, %v2518
        %v2551 = vmul.f32 %v2487, %v2519
        %v2552 = vmul.f32 %v2488, %v2520
        %v2553 = vmul.f32 %v2489, %v2521
        %v2554 = vmul.f32 %v2490, %v2522
        %v2555 = vmul.f32 %v2491, %v2523
        %v2556 = vmul.f32 %v2492, %v2524
        %v2557 = vmul.f32 %v2493, %v2525
        %v2558 = vmul.f32 %v2494, %v2526
        %v2559 = vmul.f32 %v2495, %v2527
        %v2560 = vmul.f32 %v2496, %v2528
        %v2561 = vmul.f32 %v2497, %v2529
        %v2562 = vmul.f32 %v2498, %v2530
        %v2563 = vmul.f32 %v2499, %v2531
        %v2564 = vmul.f32 %v2500, %v2532
        %v2565 = vmul.f32 %v2501, %v2533
        %v2566 = vsub.f32 %v2438, %v2534
        %v2567 = vsub.f32 %v2439, %v2535
        %v2568 = vsub.f32 %v2440, %v2536
        %v2569 = vsub.f32 %v2441, %v2537
        %v2570 = vsub.f32 %v2442, %v2538
        %v2571 = vsub.f32 %v2443, %v2539
        %v2572 = vsub.f32 %v2444, %v2540
        %v2573 = vsub.f32 %v2445, %v2541
        %v2574 = vsub.f32 %v2446, %v2542
        %v2575 = vsub.f32 %v2447, %v2543
        %v2576 = vsub.f32 %v2448, %v2544
        %v2577 = vsub.f32 %v2449, %v2545
        %v2578 = vsub.f32 %v2450, %v2546
        %v2579 = vsub.f32 %v2451, %v2547
        %v2580 = vsub.f32 %v2452, %v2548
        %v2581 = vsub.f32 %v2453, %v2549
        %v2582 = vsub.f32 %v2454, %v2550
        %v2583 = vsub.f32 %v2455, %v2551
        %v2584 = vsub.f32 %v2456, %v2552
        %v2585 = vsub.f32 %v2457, %v2553
        %v2586 = vsub.f32 %v2458, %v2554
        %v2587 = vsub.f32 %v2459, %v2555
        %v2588 = vsub.f32 %v2460, %v2556
        %v2589 = vsub.f32 %v2461, %v2557
        %v2590 = vsub.f32 %v2462, %v2558
        %v2591 = vsub.f32 %v2463, %v2559
        %v2592 = vsub.f32 %v2464, %v2560
        %v2593 = vsub.f32 %v2465, %v2561
        %v2594 = vsub.f32 %v2466, %v2562
        %v2595 = vsub.f32 %v2467, %v2563
        %v2596 = vsub.f32 %v2468, %v2564
        %v2597 = vsub.f32 %v2469, %v2565
        %vm2598 = vcmask 7168
        %v2599 = vsel %vm2598, %v2566, 0.0
        %v2600 = vsel %vm2598, %v2567, 0.0
        %v2601 = vadd.f32 %v2599, %v2600
        %v2602 = vsel %vm2598, %v2568, 0.0
        %v2603 = vadd.f32 %v2601, %v2602
        %v2604 = vsel %vm2598, %v2569, 0.0
        %v2605 = vadd.f32 %v2603, %v2604
        %v2606 = vsel %vm2598, %v2570, 0.0
        %v2607 = vadd.f32 %v2605, %v2606
        %v2608 = vsel %vm2598, %v2571, 0.0
        %v2609 = vadd.f32 %v2607, %v2608
        %v2610 = vsel %vm2598, %v2572, 0.0
        %v2611 = vadd.f32 %v2609, %v2610
        %v2612 = vsel %vm2598, %v2573, 0.0
        %v2613 = vadd.f32 %v2611, %v2612
        %v2614 = vsel %vm2598, %v2574, 0.0
        %v2615 = vadd.f32 %v2613, %v2614
        %v2616 = vsel %vm2598, %v2575, 0.0
        %v2617 = vadd.f32 %v2615, %v2616
        %v2618 = vsel %vm2598, %v2576, 0.0
        %v2619 = vadd.f32 %v2617, %v2618
        %v2620 = vsel %vm2598, %v2577, 0.0
        %v2621 = vadd.f32 %v2619, %v2620
        %v2622 = vsel %vm2598, %v2578, 0.0
        %v2623 = vadd.f32 %v2621, %v2622
        %v2624 = vsel %vm2598, %v2579, 0.0
        %v2625 = vadd.f32 %v2623, %v2624
        %v2626 = vsel %vm2598, %v2580, 0.0
        %v2627 = vadd.f32 %v2625, %v2626
        %v2628 = vsel %vm2598, %v2581, 0.0
        %v2629 = vadd.f32 %v2627, %v2628
        %v2630 = vsel %vm2598, %v2582, 0.0
        %v2631 = vadd.f32 %v2629, %v2630
        %v2632 = vsel %vm2598, %v2583, 0.0
        %v2633 = vadd.f32 %v2631, %v2632
        %v2634 = vsel %vm2598, %v2584, 0.0
        %v2635 = vadd.f32 %v2633, %v2634
        %v2636 = vsel %vm2598, %v2585, 0.0
        %v2637 = vadd.f32 %v2635, %v2636
        %v2638 = vsel %vm2598, %v2586, 0.0
        %v2639 = vadd.f32 %v2637, %v2638
        %v2640 = vsel %vm2598, %v2587, 0.0
        %v2641 = vadd.f32 %v2639, %v2640
        %v2642 = vsel %vm2598, %v2588, 0.0
        %v2643 = vadd.f32 %v2641, %v2642
        %v2644 = vsel %vm2598, %v2589, 0.0
        %v2645 = vadd.f32 %v2643, %v2644
        %v2646 = vsel %vm2598, %v2590, 0.0
        %v2647 = vadd.f32 %v2645, %v2646
        %v2648 = vsel %vm2598, %v2591, 0.0
        %v2649 = vadd.f32 %v2647, %v2648
        %v2650 = vsel %vm2598, %v2592, 0.0
        %v2651 = vadd.f32 %v2649, %v2650
        %v2652 = vsel %vm2598, %v2593, 0.0
        %v2653 = vadd.f32 %v2651, %v2652
        %v2654 = vsel %vm2598, %v2594, 0.0
        %v2655 = vadd.f32 %v2653, %v2654
        %v2656 = vsel %vm2598, %v2595, 0.0
        %v2657 = vadd.f32 %v2655, %v2656
        %v2658 = vsel %vm2598, %v2596, 0.0
        %v2659 = vadd.f32 %v2657, %v2658
        %v2660 = vsel %vm2598, %v2597, 0.0
        %v2661 = vadd.f32 %v2659, %v2660
        %2662 = vadd.xlane.f32.xlu0 %v2661
        %v2663 = vpop.xlane.xlu0 %2662
        %v2664 = vrot.slane %v2663, 4
        %v2665 = vadd.f32 %v2663, %v2664
        %v2666 = vrot.slane %v2665, 2
        %v2667 = vadd.f32 %v2665, %v2666
        %v2668 = vrot.slane %v2667, 1
        %v2669 = vadd.f32 %v2667, %v2668
        %s2670 = vtos %v2669
        %v2671 = vstv %s2670
        %2672 = vst [vmem:[%s271] sm:$0xff] %v2671
        %s2673 = sand.u32 %s148, 1
        %s2674 = scalar_lea.sflag [#allocation3], %s2673
        %s2675 = sand.u32 %s148, 1
        %s2676 = smul.addr %s2675, 8
        %s2677 = scalar_lea.vmem [#allocation2], %s2676
        // Predicated region
        $region37: #{tpu_custom_call.1} parent=35 // pred_check
          %p2678 = pneg %p158
        $region38: #{tpu_custom_call.1} parent=35 // pred_check_branch
          %2680 = sbr.rel (%p2678) target = $region40
        $region39: #{tpu_custom_call.1} parent=35 // pred_region
          %2682 = vsyncadd %s2674, 0
          %s2683 = sadd.s32 %s23, %s22
          %s2684 = smul.addr %s2683, 8
          %s2685 = scalar_lea.hbm %s4, %s2684
          %s2687 = sshll.u32 %s2677, 4
          %s2688 = int_to_ptr.vmem [resolvable:$true] %s2687
          %s2689 = sshll.u32 %s2685, 4
          %s2690 = int_to_ptr.hbm [resolvable:$true] %s2689
          %2692 = dma.vmem_to_hbm [thread:$0]  %s2688, 128, %s2690, %s2674
        $region40: #{tpu_custom_call.1} parent=35 // pred_fallthru
          _
      $region36: #{tpu_custom_call.1} parent=5 // pred_fallthru
        _
      %p2693 = scmp.le.s32.totalorder 2, %s13
      // Predicated region
      $region41: #{tpu_custom_call.1} parent=5 // pred_check
        %p2694 = pneg %p2693
      $region42: #{tpu_custom_call.1} parent=5 // pred_check_branch
        %2696 = sbr.rel (%p2694) target = $region44
      $region43: #{tpu_custom_call.1} parent=5 // pred_region
        %s2697 = ssub.s32 %s13, 2
        // Predicated region
        $region45: #{tpu_custom_call.1} parent=43 // pred_check
          %p2698 = pneg %p164
        $region46: #{tpu_custom_call.1} parent=43 // pred_check_branch
          %2700 = sbr.rel (%p2698) target = $region48
        $region47: #{tpu_custom_call.1} parent=43 // pred_region
          %s2701 = sand.u32 %s149, 1
          %s2702 = scalar_lea.sflag [#allocation3], %s2701
          %s2703 = sand.u32 %s149, 1
          %s2704 = smul.addr %s2703, 8
          %s2705 = scalar_lea.vmem [#allocation2], %s2704
          %2707 = dma.done %s2702, 128
        $region48: #{tpu_custom_call.1} parent=43 // pred_fallthru
          _
      $region44: #{tpu_custom_call.1} parent=5 // pred_fallthru
        _
    $region6: #{tpu_custom_call.1} parent=1 // loop_footer
      %s17 = sadd.s32 1, %s13
    $region7: #{tpu_custom_call.1} parent=1 // loop_footer_branch
      %12 = sbr.rel target = $region3
    $region8: #{tpu_custom_call.1} parent=1 // loop_exit
      _
    %2708 = vsyncpa [#allocation3], 1
    %s2709 = scalar_lea.sflag [#allocation3], 1
    %2710 = vsyncpa %s2709, 1

</llo_original>
